<compile_context>
chip_gen: v6e
topology: v6e:2x2x1
jax: 0.10.0
libtpu: 0.0.40
codegen_flags: <defaults>
</compile_context>

<pallas_src>
import functools
import math

import jax
import jax.numpy as jnp
from jax.experimental import pallas as pl
from jax.experimental.pallas import tpu as pltpu

_LANE = 128
_SUBLANE = 8


def _round_up(n, m):
    return ((n + m - 1) // m) * m


def _pick_time_chunk(T, cap=32):
    """Largest divisor of T that is <= cap (amortizes grid-step overhead)."""
    tc = 1
    for c in range(1, min(T, cap) + 1):
        if T % c == 0:
            tc = c
    return tc


def _pad_gate_cols(w, H, Hp):
    """(..., 4H) -> (..., 4Hp): zero-pad each of the 4 gate blocks to Hp cols."""
    if Hp == H:
        return w
    z = jnp.zeros(w.shape[:-1] + (Hp - H,), w.dtype)
    parts = []
    for g in range(4):
        parts.append(w[..., g * H:(g + 1) * H])
        parts.append(z)
    return jnp.concatenate(parts, axis=-1)


def _pad_rows_grouped(w, H, Hp, groups):
    """(groups*H, C) -> (groups*Hp, C): zero rows appended per direction group."""
    if Hp == H:
        return w
    C = w.shape[1]
    parts = []
    for g in range(groups):
        parts.append(w[g * H:(g + 1) * H, :])
        parts.append(jnp.zeros((Hp - H, C), w.dtype))
    return jnp.concatenate(parts, axis=0)


# ----------------------------------------------------------------------------
# Pallas kernel: the serial LSTM recurrence over one time-chunk, one direction.
#   gx_ref : (Tc, Bp, 4Hp)  precomputed x-projection + bias (f32)
#   whh_ref: (Hp, 4Hp)      transposed recurrent weight (f32)
#   out_ref: (Tc, Bp, Hp)   hidden-state sequence for this chunk
#   h_sc/c_sc: (Bp, Hp)     f32 VMEM scratch carried across time chunks
# Gate order is PyTorch's [i, f, g, o].
# ----------------------------------------------------------------------------
def _lstm_chunk_kernel(gx_ref, whh_ref, out_ref, h_sc, c_sc, *, Tc, Hp):
    d = pl.program_id(0)        # direction: 0 = forward, 1 = reverse
    step = pl.program_id(1)     # time-chunk index (sequential, "arbitrary")

    @pl.when(step == 0)
    def _():
        h_sc[...] = jnp.zeros_like(h_sc)
        c_sc[...] = jnp.zeros_like(c_sc)

    whh = whh_ref[...]          # hoisted: loaded once per grid step
    h = h_sc[...]
    c = c_sc[...]

    # Unrolled serial loop over the chunk.  Forward walks s; reverse walks
    # Tc-1-s (the chunk itself is already reversed via the index_map), so the
    # net visit order for d==1 is t = T-1 .. 0.
    for s in range(Tc):
        t = s + d * (Tc - 1 - 2 * s)
        gates = gx_ref[t] + jnp.dot(h, whh, preferred_element_type=jnp.float32)
        # Lane-aligned slices (Hp is a multiple of 128).
        i_g = jax.nn.sigmoid(gates[:, 0 * Hp:1 * Hp])
        f_g = jax.nn.sigmoid(gates[:, 1 * Hp:2 * Hp])
        g_g = jnp.tanh(gates[:, 2 * Hp:3 * Hp])
        o_g = jax.nn.sigmoid(gates[:, 3 * Hp:4 * Hp])
        c = f_g * c + i_g * g_g
        h = o_g * jnp.tanh(c)
        out_ref[t] = h.astype(out_ref.dtype)

    h_sc[...] = h
    c_sc[...] = c


def _lstm_recurrence(gx, whh, *, Hp, Tc):
    """gx: (num_dirs, T, Bp, 4Hp); whh: (num_dirs, Hp, 4Hp).
    Returns (T, Bp, num_dirs * Hp), direction d in column block [d*Hp, (d+1)*Hp)."""
    num_dirs, T, Bp, _ = gx.shape
    nC = T // Tc

    # Direction 1 visits chunks (and in-chunk steps) in reverse time order.
    def gx_idx(d, i):
        return (d, i + d * (nC - 1 - 2 * i), 0, 0)

    def whh_idx(d, i):
        return (d, 0, 0)

    def out_idx(d, i):
        return (i + d * (nC - 1 - 2 * i), 0, d)

    kernel = functools.partial(_lstm_chunk_kernel, Tc=Tc, Hp=Hp)
    return pl.pallas_call(
        kernel,
        out_shape=jax.ShapeDtypeStruct((T, Bp, num_dirs * Hp), gx.dtype),
        grid_spec=pltpu.PrefetchScalarGridSpec(
            num_scalar_prefetch=0,
            grid=(num_dirs, nC),
            in_specs=[
                pl.BlockSpec((None, Tc, Bp, 4 * Hp), gx_idx),
                pl.BlockSpec((None, Hp, 4 * Hp), whh_idx),
            ],
            out_specs=pl.BlockSpec((Tc, Bp, Hp), out_idx),
            scratch_shapes=[
                pltpu.VMEM((Bp, Hp), jnp.float32),   # h (per-core)
                pltpu.VMEM((Bp, Hp), jnp.float32),   # c (per-core)
            ],
        ),
        # Direction axis is independent (own scratch per core on v7x);
        # time-chunk axis carries h/c -> must stay "arbitrary".
        compiler_params=pltpu.CompilerParams(
            dimension_semantics=("parallel", "arbitrary")),
        # For large hidden sizes: add vmem_limit_bytes=... here and keep
        # weights in bf16 / Buffered(1) to fit v7x's 64 MiB VMEM.
    )(gx, whh)


# ----------------------------------------------------------------------------
# Full module forward: multi-layer (optionally bidirectional) LSTM, batch_first.
# ----------------------------------------------------------------------------
def lstm_forward(x_btd, params, *, num_layers, bidirectional):
    """x_btd: (B, T, latent_dim) -> (B, T, num_dirs * hidden)."""
    num_dirs = 2 if bidirectional else 1
    H = params[(0, 0)][1].shape[1]          # w_hh: (4H, H)
    Hp = _round_up(H, _LANE)
    B, T, _ = x_btd.shape
    Bp = _round_up(B, _SUBLANE)
    Tc = _pick_time_chunk(T)

    x_p = jnp.pad(x_btd, ((0, Bp - B), (0, 0), (0, 0))) if Bp != B else x_btd

    layer_y = None                           # (T, Bp, num_dirs*Hp), time-major
    for layer in range(num_layers):
        wih_list, whh_list, bias_list = [], [], []
        for d in range(num_dirs):
            w_ih, w_hh, b_ih, b_hh = params[(layer, d)]
            wih_t = _pad_gate_cols(jnp.transpose(w_ih), H, Hp)      # (in, 4Hp)
            if layer > 0:
                # Previous layer's output is padded per direction -> pad the
                # matching input rows with zeros.
                wih_t = _pad_rows_grouped(wih_t, H, Hp, num_dirs)   # (dirs*Hp, 4Hp)
            whh_t = _pad_gate_cols(jnp.transpose(w_hh), H, Hp)      # (H, 4Hp)
            whh_t = jnp.pad(whh_t, ((0, Hp - H), (0, 0)))           # (Hp, 4Hp)
            bias = _pad_gate_cols((b_ih + b_hh)[None, :], H, Hp)    # (1, 4Hp)
            wih_list.append(wih_t)
            whh_list.append(whh_t)
            bias_list.append(bias)

        # Input projection for ALL timesteps at once (big GEMM, bias folded).
        # Produced directly in time-major layout so the recurrence and the
        # layer-to-layer hand-off need no transposes.
        if layer == 0:
            gx = [jnp.einsum('btd,dg->tbg', x_p, wih_list[d]) + bias_list[d]
                  for d in range(num_dirs)]
        else:
            gx = [jnp.einsum('tbe,eg->tbg', layer_y, wih_list[d]) + bias_list[d]
                  for d in range(num_dirs)]
        gx = jnp.stack(gx, axis=0)            # (num_dirs, T, Bp, 4Hp)
        whh = jnp.stack(whh_list, axis=0)     # (num_dirs, Hp, 4Hp)

        layer_y = _lstm_recurrence(gx, whh, Hp=Hp, Tc=Tc)

    # Strip padding, fuse directions, and return batch-first (B, T, dirs*H).
    cols = [layer_y[:, :B, d * Hp:d * Hp + H] for d in range(num_dirs)]
    y = jnp.concatenate(cols, axis=-1) if num_dirs > 1 else cols[0]
    return jnp.transpose(y, (1, 0, 2))


# ----------------------------------------------------------------------------
# Pure-JAX reference (lax.scan) for correctness checking.
# ----------------------------------------------------------------------------
def _ref_single_direction(x_tbd, w_ih, w_hh, b_ih, b_hh, reverse):
    T, B, _ = x_tbd.shape
    H = w_hh.shape[1]

    def step(carry, x_t):
        h, c = carry
        gates = x_t @ w_ih.T + b_ih + h @ w_hh.T + b_hh
        i, f, g, o = jnp.split(gates, 4, axis=-1)
        i = jax.nn.sigmoid(i)
        f = jax.nn.sigmoid(f)
        g = jnp.tanh(g)
        o = jax.nn.sigmoid(o)
        c = f * c + i * g
        h = o * jnp.tanh(c)
        return (h, c), h

    xs = x_tbd[::-1] if reverse else x_tbd
    _, hs = jax.lax.scan(step, (jnp.zeros((B, H), x_tbd.dtype),
                                jnp.zeros((B, H), x_tbd.dtype)), xs)
    return hs[::-1] if reverse else hs


def ref_lstm_forward(x_btd, params, *, num_layers, bidirectional):
    num_dirs = 2 if bidirectional else 1
    layer_in = jnp.transpose(x_btd, (1, 0, 2))
    for layer in range(num_layers):
        outs = [
            _ref_single_direction(layer_in, *params[(layer, d)], reverse=(d == 1))
            for d in range(num_dirs)
        ]
        layer_in = jnp.concatenate(outs, axis=-1) if num_dirs == 2 else outs[0]
    return jnp.transpose(layer_in, (1, 0, 2))


# ----------------------------------------------------------------------------
# Deterministic parameter init (same distribution as nn.LSTM: U(-k, k),
# k = 1/sqrt(hidden_size)).
# ----------------------------------------------------------------------------
def init_lstm_params(key, latent_dim, hidden_size, num_layers, bidirectional):
    num_dirs = 2 if bidirectional else 1
    k = 1.0 / math.sqrt(hidden_size)
    params = {}
    for layer in range(num_layers):
        in_size = latent_dim if layer == 0 else hidden_size * num_dirs
        for d in range(num_dirs):
            key, k1, k2, k3, k4 = jax.random.split(key, 5)
            w_ih = jax.random.uniform(k1, (4 * hidden_size, in_size),
                                      jnp.float32, -k, k)
            w_hh = jax.random.uniform(k2, (4 * hidden_size, hidden_size),
                                      jnp.float32, -k, k)
            b_ih = jax.random.uniform(k3, (4 * hidden_size,), jnp.float32, -k, k)
            b_hh = jax.random.uniform(k4, (4 * hidden_size,), jnp.float32, -k, k)
            params[(layer, d)] = (w_ih, w_hh, b_ih, b_hh)
    return params


if __name__ == "__main__":
    # Small shapes consistent with the module's forward: x is (B, T, latent_dim).
    B, T = 2, 8
    latent_dim = 32
    hidden_size = 32
    lstm_layers = 2
    bidirectional = True

    key = jax.random.PRNGKey(0)
    key, xk, pk = jax.random.split(key, 3)
    x = jax.random.normal(xk, (B, T, latent_dim), dtype=jnp.float32)
    params = init_lstm_params(pk, latent_dim, hidden_size, lstm_layers,
                              bidirectional)

    run = jax.jit(functools.partial(lstm_forward, num_layers=lstm_layers,
                                    bidirectional=bidirectional))
    out = jax.block_until_ready(run(x, params))

    expected_feat = hidden_size * (2 if bidirectional else 1)
    assert out.shape == (B, T, expected_feat), out.shape

    ref = ref_lstm_forward(x, params, num_layers=lstm_layers,
                           bidirectional=bidirectional)
    assert jnp.allclose(out, ref, rtol=1e-4, atol=2e-4), (
        float(jnp.max(jnp.abs(out - ref))))

    print("KERNEL_OK")
</pallas_src>

<mosaic_0001>
module attributes {stable_mosaic.version = 11 : i64} {
  func.func @_lstm_chunk_kernel(%arg0: i32, %arg1: i32, %arg2: memref<1x8x8x512xf32, #tpu.memory_space<vmem>>, %arg3: memref<1x128x512xf32, #tpu.memory_space<vmem>>, %arg4: memref<8x8x128xf32, #tpu.memory_space<vmem>>, %arg5: memref<8x128xf32, #tpu.memory_space<vmem>>, %arg6: memref<8x128xf32, #tpu.memory_space<vmem>>) attributes {dimension_semantics = [#tpu.dimension_semantics<parallel>, #tpu.dimension_semantics<arbitrary>], iteration_bounds = array<i64: 2, 1>, scalar_prefetch = 0 : i64, scratch_operands = 2 : i64, tpu.core_type = #tpu.core_type<tc>, window_params = [{transform_indices = @transform_0, window_bounds = array<i64: 1, 8, 8, 512>}, {transform_indices = @transform_1, window_bounds = array<i64: 1, 128, 512>}, {transform_indices = @transform_2, window_bounds = array<i64: 8, 8, 128>}]} {
    %c0_i32 = arith.constant 0 : i32
    %0 = arith.cmpi eq, %arg1, %c0_i32 : i32
    %1 = arith.extui %0 : i1 to i32
    %c0_i32_0 = arith.constant 0 : i32
    %2 = arith.cmpi ne, %1, %c0_i32_0 : i32
    scf.if %2 {
      %cst_87 = arith.constant 0.000000e+00 : f32
      %297 = vector.broadcast %cst_87 : f32 to vector<8x128xf32>
      %c0_88 = arith.constant 0 : index
      %c0_89 = arith.constant 0 : index
      %298 = vector.load %arg5[%c0_88, %c0_89] : memref<8x128xf32, #tpu.memory_space<vmem>>, vector<8x128xf32>
      tpu.vector_store %arg5[%c0_88, %c0_89], %297 {strides = array<i32>} : memref<8x128xf32, #tpu.memory_space<vmem>>, vector<8x128xf32>,
      %cst_90 = arith.constant 0.000000e+00 : f32
      %299 = vector.broadcast %cst_90 : f32 to vector<8x128xf32>
      %c0_91 = arith.constant 0 : index
      %c0_92 = arith.constant 0 : index
      %300 = vector.load %arg6[%c0_91, %c0_92] : memref<8x128xf32, #tpu.memory_space<vmem>>, vector<8x128xf32>
      tpu.vector_store %arg6[%c0_91, %c0_92], %299 {strides = array<i32>} : memref<8x128xf32, #tpu.memory_space<vmem>>, vector<8x128xf32>,
    } else {
    }
    %c0 = arith.constant 0 : index
    %c0_1 = arith.constant 0 : index
    %c0_2 = arith.constant 0 : index
    %3 = vector.load %arg3[%c0, %c0_1, %c0_2] : memref<1x128x512xf32, #tpu.memory_space<vmem>>, vector<1x128x512xf32>
    %4 = vector.shape_cast %3 : vector<1x128x512xf32> to vector<128x512xf32>
    %c0_3 = arith.constant 0 : index
    %c0_4 = arith.constant 0 : index
    %5 = vector.load %arg5[%c0_3, %c0_4] : memref<8x128xf32, #tpu.memory_space<vmem>>, vector<8x128xf32>
    %c0_5 = arith.constant 0 : index
    %c0_6 = arith.constant 0 : index
    %6 = vector.load %arg6[%c0_5, %c0_6] : memref<8x128xf32, #tpu.memory_space<vmem>>, vector<8x128xf32>
    %c7_i32 = arith.constant 7 : i32
    %7 = arith.muli %arg0, %c7_i32 : i32
    %c0_i32_7 = arith.constant 0 : i32
    %8 = arith.addi %c0_i32_7, %7 : i32
    %c0_8 = arith.constant 0 : index
    %9 = arith.index_cast %8 : i32 to index
    %c0_9 = arith.constant 0 : index
    %c0_10 = arith.constant 0 : index
    %10 = vector.load %arg2[%c0_8, %9, %c0_9, %c0_10] : memref<1x8x8x512xf32, #tpu.memory_space<vmem>>, vector<1x1x8x512xf32>
    %11 = vector.shape_cast %10 : vector<1x1x8x512xf32> to vector<8x512xf32>
    %cst = arith.constant dense<0.000000e+00> : vector<8x512xf32>
    %12 = tpu.matmul %5, %4, %cst {dimension_numbers = #tpu.dot_dimension_numbers<[1], [0], [0], [1], [0, 0, 1, 1], [], []>} : vector<8x128xf32>, vector<128x512xf32>, vector<8x512xf32> -> vector<8x512xf32>
    %13 = arith.addf %11, %12 : vector<8x512xf32>
    %14 = vector.extract_strided_slice %13 {offsets = [0, 0], sizes = [8, 128], strides = [1, 1]} : vector<8x512xf32> to vector<8x128xf32>
    %15 = arith.negf %14 : vector<8x128xf32>
    %16 = math.exp %15 : vector<8x128xf32>
    %cst_11 = arith.constant 1.000000e+00 : f32
    %17 = vector.broadcast %cst_11 : f32 to vector<8x128xf32>
    %18 = arith.addf %17, %16 : vector<8x128xf32>
    %19 = arith.divf %17, %18 : vector<8x128xf32>
    %20 = vector.extract_strided_slice %13 {offsets = [0, 128], sizes = [8, 128], strides = [1, 1]} : vector<8x512xf32> to vector<8x128xf32>
    %21 = arith.negf %20 : vector<8x128xf32>
    %22 = math.exp %21 : vector<8x128xf32>
    %cst_12 = arith.constant 1.000000e+00 : f32
    %23 = vector.broadcast %cst_12 : f32 to vector<8x128xf32>
    %24 = arith.addf %23, %22 : vector<8x128xf32>
    %25 = arith.divf %23, %24 : vector<8x128xf32>
    %26 = vector.extract_strided_slice %13 {offsets = [0, 256], sizes = [8, 128], strides = [1, 1]} : vector<8x512xf32> to vector<8x128xf32>
    %27 = math.tanh %26 : vector<8x128xf32>
    %28 = vector.extract_strided_slice %13 {offsets = [0, 384], sizes = [8, 128], strides = [1, 1]} : vector<8x512xf32> to vector<8x128xf32>
    %29 = arith.negf %28 : vector<8x128xf32>
    %30 = math.exp %29 : vector<8x128xf32>
    %cst_13 = arith.constant 1.000000e+00 : f32
    %31 = vector.broadcast %cst_13 : f32 to vector<8x128xf32>
    %32 = arith.addf %31, %30 : vector<8x128xf32>
    %33 = arith.divf %31, %32 : vector<8x128xf32>
    %34 = arith.mulf %25, %6 : vector<8x128xf32>
    %35 = arith.mulf %19, %27 : vector<8x128xf32>
    %36 = arith.addf %34, %35 : vector<8x128xf32>
    %37 = math.tanh %36 : vector<8x128xf32>
    %38 = arith.mulf %33, %37 : vector<8x128xf32>
    %39 = arith.index_cast %8 : i32 to index
    %c0_14 = arith.constant 0 : index
    %c0_15 = arith.constant 0 : index
    %40 = vector.load %arg4[%39, %c0_14, %c0_15] : memref<8x8x128xf32, #tpu.memory_space<vmem>>, vector<1x8x128xf32>
    %41 = vector.shape_cast %40 : vector<1x8x128xf32> to vector<8x128xf32>
    %42 = vector.shape_cast %38 : vector<8x128xf32> to vector<1x8x128xf32>
    tpu.vector_store %arg4[%39, %c0_14, %c0_15], %42 {strides = array<i32>} : memref<8x8x128xf32, #tpu.memory_space<vmem>>, vector<1x8x128xf32>,
    %c5_i32 = arith.constant 5 : i32
    %43 = arith.muli %arg0, %c5_i32 : i32
    %c1_i32 = arith.constant 1 : i32
    %44 = arith.addi %c1_i32, %43 : i32
    %c0_16 = arith.constant 0 : index
    %45 = arith.index_cast %44 : i32 to index
    %c0_17 = arith.constant 0 : index
    %c0_18 = arith.constant 0 : index
    %46 = vector.load %arg2[%c0_16, %45, %c0_17, %c0_18] : memref<1x8x8x512xf32, #tpu.memory_space<vmem>>, vector<1x1x8x512xf32>
    %47 = vector.shape_cast %46 : vector<1x1x8x512xf32> to vector<8x512xf32>
    %cst_19 = arith.constant dense<0.000000e+00> : vector<8x512xf32>
    %48 = tpu.matmul %38, %4, %cst_19 {dimension_numbers = #tpu.dot_dimension_numbers<[1], [0], [0], [1], [0, 0, 1, 1], [], []>} : vector<8x128xf32>, vector<128x512xf32>, vector<8x512xf32> -> vector<8x512xf32>
    %49 = arith.addf %47, %48 : vector<8x512xf32>
    %50 = vector.extract_strided_slice %49 {offsets = [0, 0], sizes = [8, 128], strides = [1, 1]} : vector<8x512xf32> to vector<8x128xf32>
    %51 = arith.negf %50 : vector<8x128xf32>
    %52 = math.exp %51 : vector<8x128xf32>
    %cst_20 = arith.constant 1.000000e+00 : f32
    %53 = vector.broadcast %cst_20 : f32 to vector<8x128xf32>
    %54 = arith.addf %53, %52 : vector<8x128xf32>
    %55 = arith.divf %53, %54 : vector<8x128xf32>
    %56 = vector.extract_strided_slice %49 {offsets = [0, 128], sizes = [8, 128], strides = [1, 1]} : vector<8x512xf32> to vector<8x128xf32>
    %57 = arith.negf %56 : vector<8x128xf32>
    %58 = math.exp %57 : vector<8x128xf32>
    %cst_21 = arith.constant 1.000000e+00 : f32
    %59 = vector.broadcast %cst_21 : f32 to vector<8x128xf32>
    %60 = arith.addf %59, %58 : vector<8x128xf32>
    %61 = arith.divf %59, %60 : vector<8x128xf32>
    %62 = vector.extract_strided_slice %49 {offsets = [0, 256], sizes = [8, 128], strides = [1, 1]} : vector<8x512xf32> to vector<8x128xf32>
    %63 = math.tanh %62 : vector<8x128xf32>
    %64 = vector.extract_strided_slice %49 {offsets = [0, 384], sizes = [8, 128], strides = [1, 1]} : vector<8x512xf32> to vector<8x128xf32>
    %65 = arith.negf %64 : vector<8x128xf32>
    %66 = math.exp %65 : vector<8x128xf32>
    %cst_22 = arith.constant 1.000000e+00 : f32
    %67 = vector.broadcast %cst_22 : f32 to vector<8x128xf32>
    %68 = arith.addf %67, %66 : vector<8x128xf32>
    %69 = arith.divf %67, %68 : vector<8x128xf32>
    %70 = arith.mulf %61, %36 : vector<8x128xf32>
    %71 = arith.mulf %55, %63 : vector<8x128xf32>
    %72 = arith.addf %70, %71 : vector<8x128xf32>
    %73 = math.tanh %72 : vector<8x128xf32>
    %74 = arith.mulf %69, %73 : vector<8x128xf32>
    %75 = arith.index_cast %44 : i32 to index
    %c0_23 = arith.constant 0 : index
    %c0_24 = arith.constant 0 : index
    %76 = vector.load %arg4[%75, %c0_23, %c0_24] : memref<8x8x128xf32, #tpu.memory_space<vmem>>, vector<1x8x128xf32>
    %77 = vector.shape_cast %76 : vector<1x8x128xf32> to vector<8x128xf32>
    %78 = vector.shape_cast %74 : vector<8x128xf32> to vector<1x8x128xf32>
    tpu.vector_store %arg4[%75, %c0_23, %c0_24], %78 {strides = array<i32>} : memref<8x8x128xf32, #tpu.memory_space<vmem>>, vector<1x8x128xf32>,
    %c3_i32 = arith.constant 3 : i32
    %79 = arith.muli %arg0, %c3_i32 : i32
    %c2_i32 = arith.constant 2 : i32
    %80 = arith.addi %c2_i32, %79 : i32
    %c0_25 = arith.constant 0 : index
    %81 = arith.index_cast %80 : i32 to index
    %c0_26 = arith.constant 0 : index
    %c0_27 = arith.constant 0 : index
    %82 = vector.load %arg2[%c0_25, %81, %c0_26, %c0_27] : memref<1x8x8x512xf32, #tpu.memory_space<vmem>>, vector<1x1x8x512xf32>
    %83 = vector.shape_cast %82 : vector<1x1x8x512xf32> to vector<8x512xf32>
    %cst_28 = arith.constant dense<0.000000e+00> : vector<8x512xf32>
    %84 = tpu.matmul %74, %4, %cst_28 {dimension_numbers = #tpu.dot_dimension_numbers<[1], [0], [0], [1], [0, 0, 1, 1], [], []>} : vector<8x128xf32>, vector<128x512xf32>, vector<8x512xf32> -> vector<8x512xf32>
    %85 = arith.addf %83, %84 : vector<8x512xf32>
    %86 = vector.extract_strided_slice %85 {offsets = [0, 0], sizes = [8, 128], strides = [1, 1]} : vector<8x512xf32> to vector<8x128xf32>
    %87 = arith.negf %86 : vector<8x128xf32>
    %88 = math.exp %87 : vector<8x128xf32>
    %cst_29 = arith.constant 1.000000e+00 : f32
    %89 = vector.broadcast %cst_29 : f32 to vector<8x128xf32>
    %90 = arith.addf %89, %88 : vector<8x128xf32>
    %91 = arith.divf %89, %90 : vector<8x128xf32>
    %92 = vector.extract_strided_slice %85 {offsets = [0, 128], sizes = [8, 128], strides = [1, 1]} : vector<8x512xf32> to vector<8x128xf32>
    %93 = arith.negf %92 : vector<8x128xf32>
    %94 = math.exp %93 : vector<8x128xf32>
    %cst_30 = arith.constant 1.000000e+00 : f32
    %95 = vector.broadcast %cst_30 : f32 to vector<8x128xf32>
    %96 = arith.addf %95, %94 : vector<8x128xf32>
    %97 = arith.divf %95, %96 : vector<8x128xf32>
    %98 = vector.extract_strided_slice %85 {offsets = [0, 256], sizes = [8, 128], strides = [1, 1]} : vector<8x512xf32> to vector<8x128xf32>
    %99 = math.tanh %98 : vector<8x128xf32>
    %100 = vector.extract_strided_slice %85 {offsets = [0, 384], sizes = [8, 128], strides = [1, 1]} : vector<8x512xf32> to vector<8x128xf32>
    %101 = arith.negf %100 : vector<8x128xf32>
    %102 = math.exp %101 : vector<8x128xf32>
    %cst_31 = arith.constant 1.000000e+00 : f32
    %103 = vector.broadcast %cst_31 : f32 to vector<8x128xf32>
    %104 = arith.addf %103, %102 : vector<8x128xf32>
    %105 = arith.divf %103, %104 : vector<8x128xf32>
    %106 = arith.mulf %97, %72 : vector<8x128xf32>
    %107 = arith.mulf %91, %99 : vector<8x128xf32>
    %108 = arith.addf %106, %107 : vector<8x128xf32>
    %109 = math.tanh %108 : vector<8x128xf32>
    %110 = arith.mulf %105, %109 : vector<8x128xf32>
    %111 = arith.index_cast %80 : i32 to index
    %c0_32 = arith.constant 0 : index
    %c0_33 = arith.constant 0 : index
    %112 = vector.load %arg4[%111, %c0_32, %c0_33] : memref<8x8x128xf32, #tpu.memory_space<vmem>>, vector<1x8x128xf32>
    %113 = vector.shape_cast %112 : vector<1x8x128xf32> to vector<8x128xf32>
    %114 = vector.shape_cast %110 : vector<8x128xf32> to vector<1x8x128xf32>
    tpu.vector_store %arg4[%111, %c0_32, %c0_33], %114 {strides = array<i32>} : memref<8x8x128xf32, #tpu.memory_space<vmem>>, vector<1x8x128xf32>,
    %c1_i32_34 = arith.constant 1 : i32
    %115 = arith.muli %arg0, %c1_i32_34 : i32
    %c3_i32_35 = arith.constant 3 : i32
    %116 = arith.addi %c3_i32_35, %115 : i32
    %c0_36 = arith.constant 0 : index
    %117 = arith.index_cast %116 : i32 to index
    %c0_37 = arith.constant 0 : index
    %c0_38 = arith.constant 0 : index
    %118 = vector.load %arg2[%c0_36, %117, %c0_37, %c0_38] : memref<1x8x8x512xf32, #tpu.memory_space<vmem>>, vector<1x1x8x512xf32>
    %119 = vector.shape_cast %118 : vector<1x1x8x512xf32> to vector<8x512xf32>
    %cst_39 = arith.constant dense<0.000000e+00> : vector<8x512xf32>
    %120 = tpu.matmul %110, %4, %cst_39 {dimension_numbers = #tpu.dot_dimension_numbers<[1], [0], [0], [1], [0, 0, 1, 1], [], []>} : vector<8x128xf32>, vector<128x512xf32>, vector<8x512xf32> -> vector<8x512xf32>
    %121 = arith.addf %119, %120 : vector<8x512xf32>
    %122 = vector.extract_strided_slice %121 {offsets = [0, 0], sizes = [8, 128], strides = [1, 1]} : vector<8x512xf32> to vector<8x128xf32>
    %123 = arith.negf %122 : vector<8x128xf32>
    %124 = math.exp %123 : vector<8x128xf32>
    %cst_40 = arith.constant 1.000000e+00 : f32
    %125 = vector.broadcast %cst_40 : f32 to vector<8x128xf32>
    %126 = arith.addf %125, %124 : vector<8x128xf32>
    %127 = arith.divf %125, %126 : vector<8x128xf32>
    %128 = vector.extract_strided_slice %121 {offsets = [0, 128], sizes = [8, 128], strides = [1, 1]} : vector<8x512xf32> to vector<8x128xf32>
    %129 = arith.negf %128 : vector<8x128xf32>
    %130 = math.exp %129 : vector<8x128xf32>
    %cst_41 = arith.constant 1.000000e+00 : f32
    %131 = vector.broadcast %cst_41 : f32 to vector<8x128xf32>
    %132 = arith.addf %131, %130 : vector<8x128xf32>
    %133 = arith.divf %131, %132 : vector<8x128xf32>
    %134 = vector.extract_strided_slice %121 {offsets = [0, 256], sizes = [8, 128], strides = [1, 1]} : vector<8x512xf32> to vector<8x128xf32>
    %135 = math.tanh %134 : vector<8x128xf32>
    %136 = vector.extract_strided_slice %121 {offsets = [0, 384], sizes = [8, 128], strides = [1, 1]} : vector<8x512xf32> to vector<8x128xf32>
    %137 = arith.negf %136 : vector<8x128xf32>
    %138 = math.exp %137 : vector<8x128xf32>
    %cst_42 = arith.constant 1.000000e+00 : f32
    %139 = vector.broadcast %cst_42 : f32 to vector<8x128xf32>
    %140 = arith.addf %139, %138 : vector<8x128xf32>
    %141 = arith.divf %139, %140 : vector<8x128xf32>
    %142 = arith.mulf %133, %108 : vector<8x128xf32>
    %143 = arith.mulf %127, %135 : vector<8x128xf32>
    %144 = arith.addf %142, %143 : vector<8x128xf32>
    %145 = math.tanh %144 : vector<8x128xf32>
    %146 = arith.mulf %141, %145 : vector<8x128xf32>
    %147 = arith.index_cast %116 : i32 to index
    %c0_43 = arith.constant 0 : index
    %c0_44 = arith.constant 0 : index
    %148 = vector.load %arg4[%147, %c0_43, %c0_44] : memref<8x8x128xf32, #tpu.memory_space<vmem>>, vector<1x8x128xf32>
    %149 = vector.shape_cast %148 : vector<1x8x128xf32> to vector<8x128xf32>
    %150 = vector.shape_cast %146 : vector<8x128xf32> to vector<1x8x128xf32>
    tpu.vector_store %arg4[%147, %c0_43, %c0_44], %150 {strides = array<i32>} : memref<8x8x128xf32, #tpu.memory_space<vmem>>, vector<1x8x128xf32>,
    %c-1_i32 = arith.constant -1 : i32
    %151 = arith.muli %arg0, %c-1_i32 : i32
    %c4_i32 = arith.constant 4 : i32
    %152 = arith.addi %c4_i32, %151 : i32
    %c0_45 = arith.constant 0 : index
    %153 = arith.index_cast %152 : i32 to index
    %c0_46 = arith.constant 0 : index
    %c0_47 = arith.constant 0 : index
    %154 = vector.load %arg2[%c0_45, %153, %c0_46, %c0_47] : memref<1x8x8x512xf32, #tpu.memory_space<vmem>>, vector<1x1x8x512xf32>
    %155 = vector.shape_cast %154 : vector<1x1x8x512xf32> to vector<8x512xf32>
    %cst_48 = arith.constant dense<0.000000e+00> : vector<8x512xf32>
    %156 = tpu.matmul %146, %4, %cst_48 {dimension_numbers = #tpu.dot_dimension_numbers<[1], [0], [0], [1], [0, 0, 1, 1], [], []>} : vector<8x128xf32>, vector<128x512xf32>, vector<8x512xf32> -> vector<8x512xf32>
    %157 = arith.addf %155, %156 : vector<8x512xf32>
    %158 = vector.extract_strided_slice %157 {offsets = [0, 0], sizes = [8, 128], strides = [1, 1]} : vector<8x512xf32> to vector<8x128xf32>
    %159 = arith.negf %158 : vector<8x128xf32>
    %160 = math.exp %159 : vector<8x128xf32>
    %cst_49 = arith.constant 1.000000e+00 : f32
    %161 = vector.broadcast %cst_49 : f32 to vector<8x128xf32>
    %162 = arith.addf %161, %160 : vector<8x128xf32>
    %163 = arith.divf %161, %162 : vector<8x128xf32>
    %164 = vector.extract_strided_slice %157 {offsets = [0, 128], sizes = [8, 128], strides = [1, 1]} : vector<8x512xf32> to vector<8x128xf32>
    %165 = arith.negf %164 : vector<8x128xf32>
    %166 = math.exp %165 : vector<8x128xf32>
    %cst_50 = arith.constant 1.000000e+00 : f32
    %167 = vector.broadcast %cst_50 : f32 to vector<8x128xf32>
    %168 = arith.addf %167, %166 : vector<8x128xf32>
    %169 = arith.divf %167, %168 : vector<8x128xf32>
    %170 = vector.extract_strided_slice %157 {offsets = [0, 256], sizes = [8, 128], strides = [1, 1]} : vector<8x512xf32> to vector<8x128xf32>
    %171 = math.tanh %170 : vector<8x128xf32>
    %172 = vector.extract_strided_slice %157 {offsets = [0, 384], sizes = [8, 128], strides = [1, 1]} : vector<8x512xf32> to vector<8x128xf32>
    %173 = arith.negf %172 : vector<8x128xf32>
    %174 = math.exp %173 : vector<8x128xf32>
    %cst_51 = arith.constant 1.000000e+00 : f32
    %175 = vector.broadcast %cst_51 : f32 to vector<8x128xf32>
    %176 = arith.addf %175, %174 : vector<8x128xf32>
    %177 = arith.divf %175, %176 : vector<8x128xf32>
    %178 = arith.mulf %169, %144 : vector<8x128xf32>
    %179 = arith.mulf %163, %171 : vector<8x128xf32>
    %180 = arith.addf %178, %179 : vector<8x128xf32>
    %181 = math.tanh %180 : vector<8x128xf32>
    %182 = arith.mulf %177, %181 : vector<8x128xf32>
    %183 = arith.index_cast %152 : i32 to index
    %c0_52 = arith.constant 0 : index
    %c0_53 = arith.constant 0 : index
    %184 = vector.load %arg4[%183, %c0_52, %c0_53] : memref<8x8x128xf32, #tpu.memory_space<vmem>>, vector<1x8x128xf32>
    %185 = vector.shape_cast %184 : vector<1x8x128xf32> to vector<8x128xf32>
    %186 = vector.shape_cast %182 : vector<8x128xf32> to vector<1x8x128xf32>
    tpu.vector_store %arg4[%183, %c0_52, %c0_53], %186 {strides = array<i32>} : memref<8x8x128xf32, #tpu.memory_space<vmem>>, vector<1x8x128xf32>,
    %c-3_i32 = arith.constant -3 : i32
    %187 = arith.muli %arg0, %c-3_i32 : i32
    %c5_i32_54 = arith.constant 5 : i32
    %188 = arith.addi %c5_i32_54, %187 : i32
    %c0_55 = arith.constant 0 : index
    %189 = arith.index_cast %188 : i32 to index
    %c0_56 = arith.constant 0 : index
    %c0_57 = arith.constant 0 : index
    %190 = vector.load %arg2[%c0_55, %189, %c0_56, %c0_57] : memref<1x8x8x512xf32, #tpu.memory_space<vmem>>, vector<1x1x8x512xf32>
    %191 = vector.shape_cast %190 : vector<1x1x8x512xf32> to vector<8x512xf32>
    %cst_58 = arith.constant dense<0.000000e+00> : vector<8x512xf32>
    %192 = tpu.matmul %182, %4, %cst_58 {dimension_numbers = #tpu.dot_dimension_numbers<[1], [0], [0], [1], [0, 0, 1, 1], [], []>} : vector<8x128xf32>, vector<128x512xf32>, vector<8x512xf32> -> vector<8x512xf32>
    %193 = arith.addf %191, %192 : vector<8x512xf32>
    %194 = vector.extract_strided_slice %193 {offsets = [0, 0], sizes = [8, 128], strides = [1, 1]} : vector<8x512xf32> to vector<8x128xf32>
    %195 = arith.negf %194 : vector<8x128xf32>
    %196 = math.exp %195 : vector<8x128xf32>
    %cst_59 = arith.constant 1.000000e+00 : f32
    %197 = vector.broadcast %cst_59 : f32 to vector<8x128xf32>
    %198 = arith.addf %197, %196 : vector<8x128xf32>
    %199 = arith.divf %197, %198 : vector<8x128xf32>
    %200 = vector.extract_strided_slice %193 {offsets = [0, 128], sizes = [8, 128], strides = [1, 1]} : vector<8x512xf32> to vector<8x128xf32>
    %201 = arith.negf %200 : vector<8x128xf32>
    %202 = math.exp %201 : vector<8x128xf32>
    %cst_60 = arith.constant 1.000000e+00 : f32
    %203 = vector.broadcast %cst_60 : f32 to vector<8x128xf32>
    %204 = arith.addf %203, %202 : vector<8x128xf32>
    %205 = arith.divf %203, %204 : vector<8x128xf32>
    %206 = vector.extract_strided_slice %193 {offsets = [0, 256], sizes = [8, 128], strides = [1, 1]} : vector<8x512xf32> to vector<8x128xf32>
    %207 = math.tanh %206 : vector<8x128xf32>
    %208 = vector.extract_strided_slice %193 {offsets = [0, 384], sizes = [8, 128], strides = [1, 1]} : vector<8x512xf32> to vector<8x128xf32>
    %209 = arith.negf %208 : vector<8x128xf32>
    %210 = math.exp %209 : vector<8x128xf32>
    %cst_61 = arith.constant 1.000000e+00 : f32
    %211 = vector.broadcast %cst_61 : f32 to vector<8x128xf32>
    %212 = arith.addf %211, %210 : vector<8x128xf32>
    %213 = arith.divf %211, %212 : vector<8x128xf32>
    %214 = arith.mulf %205, %180 : vector<8x128xf32>
    %215 = arith.mulf %199, %207 : vector<8x128xf32>
    %216 = arith.addf %214, %215 : vector<8x128xf32>
    %217 = math.tanh %216 : vector<8x128xf32>
    %218 = arith.mulf %213, %217 : vector<8x128xf32>
    %219 = arith.index_cast %188 : i32 to index
    %c0_62 = arith.constant 0 : index
    %c0_63 = arith.constant 0 : index
    %220 = vector.load %arg4[%219, %c0_62, %c0_63] : memref<8x8x128xf32, #tpu.memory_space<vmem>>, vector<1x8x128xf32>
    %221 = vector.shape_cast %220 : vector<1x8x128xf32> to vector<8x128xf32>
    %222 = vector.shape_cast %218 : vector<8x128xf32> to vector<1x8x128xf32>
    tpu.vector_store %arg4[%219, %c0_62, %c0_63], %222 {strides = array<i32>} : memref<8x8x128xf32, #tpu.memory_space<vmem>>, vector<1x8x128xf32>,
    %c-5_i32 = arith.constant -5 : i32
    %223 = arith.muli %arg0, %c-5_i32 : i32
    %c6_i32 = arith.constant 6 : i32
    %224 = arith.addi %c6_i32, %223 : i32
    %c0_64 = arith.constant 0 : index
    %225 = arith.index_cast %224 : i32 to index
    %c0_65 = arith.constant 0 : index
    %c0_66 = arith.constant 0 : index
    %226 = vector.load %arg2[%c0_64, %225, %c0_65, %c0_66] : memref<1x8x8x512xf32, #tpu.memory_space<vmem>>, vector<1x1x8x512xf32>
    %227 = vector.shape_cast %226 : vector<1x1x8x512xf32> to vector<8x512xf32>
    %cst_67 = arith.constant dense<0.000000e+00> : vector<8x512xf32>
    %228 = tpu.matmul %218, %4, %cst_67 {dimension_numbers = #tpu.dot_dimension_numbers<[1], [0], [0], [1], [0, 0, 1, 1], [], []>} : vector<8x128xf32>, vector<128x512xf32>, vector<8x512xf32> -> vector<8x512xf32>
    %229 = arith.addf %227, %228 : vector<8x512xf32>
    %230 = vector.extract_strided_slice %229 {offsets = [0, 0], sizes = [8, 128], strides = [1, 1]} : vector<8x512xf32> to vector<8x128xf32>
    %231 = arith.negf %230 : vector<8x128xf32>
    %232 = math.exp %231 : vector<8x128xf32>
    %cst_68 = arith.constant 1.000000e+00 : f32
    %233 = vector.broadcast %cst_68 : f32 to vector<8x128xf32>
    %234 = arith.addf %233, %232 : vector<8x128xf32>
    %235 = arith.divf %233, %234 : vector<8x128xf32>
    %236 = vector.extract_strided_slice %229 {offsets = [0, 128], sizes = [8, 128], strides = [1, 1]} : vector<8x512xf32> to vector<8x128xf32>
    %237 = arith.negf %236 : vector<8x128xf32>
    %238 = math.exp %237 : vector<8x128xf32>
    %cst_69 = arith.constant 1.000000e+00 : f32
    %239 = vector.broadcast %cst_69 : f32 to vector<8x128xf32>
    %240 = arith.addf %239, %238 : vector<8x128xf32>
    %241 = arith.divf %239, %240 : vector<8x128xf32>
    %242 = vector.extract_strided_slice %229 {offsets = [0, 256], sizes = [8, 128], strides = [1, 1]} : vector<8x512xf32> to vector<8x128xf32>
    %243 = math.tanh %242 : vector<8x128xf32>
    %244 = vector.extract_strided_slice %229 {offsets = [0, 384], sizes = [8, 128], strides = [1, 1]} : vector<8x512xf32> to vector<8x128xf32>
    %245 = arith.negf %244 : vector<8x128xf32>
    %246 = math.exp %245 : vector<8x128xf32>
    %cst_70 = arith.constant 1.000000e+00 : f32
    %247 = vector.broadcast %cst_70 : f32 to vector<8x128xf32>
    %248 = arith.addf %247, %246 : vector<8x128xf32>
    %249 = arith.divf %247, %248 : vector<8x128xf32>
    %250 = arith.mulf %241, %216 : vector<8x128xf32>
    %251 = arith.mulf %235, %243 : vector<8x128xf32>
    %252 = arith.addf %250, %251 : vector<8x128xf32>
    %253 = math.tanh %252 : vector<8x128xf32>
    %254 = arith.mulf %249, %253 : vector<8x128xf32>
    %255 = arith.index_cast %224 : i32 to index
    %c0_71 = arith.constant 0 : index
    %c0_72 = arith.constant 0 : index
    %256 = vector.load %arg4[%255, %c0_71, %c0_72] : memref<8x8x128xf32, #tpu.memory_space<vmem>>, vector<1x8x128xf32>
    %257 = vector.shape_cast %256 : vector<1x8x128xf32> to vector<8x128xf32>
    %258 = vector.shape_cast %254 : vector<8x128xf32> to vector<1x8x128xf32>
    tpu.vector_store %arg4[%255, %c0_71, %c0_72], %258 {strides = array<i32>} : memref<8x8x128xf32, #tpu.memory_space<vmem>>, vector<1x8x128xf32>,
    %c-7_i32 = arith.constant -7 : i32
    %259 = arith.muli %arg0, %c-7_i32 : i32
    %c7_i32_73 = arith.constant 7 : i32
    %260 = arith.addi %c7_i32_73, %259 : i32
    %c0_74 = arith.constant 0 : index
    %261 = arith.index_cast %260 : i32 to index
    %c0_75 = arith.constant 0 : index
    %c0_76 = arith.constant 0 : index
    %262 = vector.load %arg2[%c0_74, %261, %c0_75, %c0_76] : memref<1x8x8x512xf32, #tpu.memory_space<vmem>>, vector<1x1x8x512xf32>
    %263 = vector.shape_cast %262 : vector<1x1x8x512xf32> to vector<8x512xf32>
    %cst_77 = arith.constant dense<0.000000e+00> : vector<8x512xf32>
    %264 = tpu.matmul %254, %4, %cst_77 {dimension_numbers = #tpu.dot_dimension_numbers<[1], [0], [0], [1], [0, 0, 1, 1], [], []>} : vector<8x128xf32>, vector<128x512xf32>, vector<8x512xf32> -> vector<8x512xf32>
    %265 = arith.addf %263, %264 : vector<8x512xf32>
    %266 = vector.extract_strided_slice %265 {offsets = [0, 0], sizes = [8, 128], strides = [1, 1]} : vector<8x512xf32> to vector<8x128xf32>
    %267 = arith.negf %266 : vector<8x128xf32>
    %268 = math.exp %267 : vector<8x128xf32>
    %cst_78 = arith.constant 1.000000e+00 : f32
    %269 = vector.broadcast %cst_78 : f32 to vector<8x128xf32>
    %270 = arith.addf %269, %268 : vector<8x128xf32>
    %271 = arith.divf %269, %270 : vector<8x128xf32>
    %272 = vector.extract_strided_slice %265 {offsets = [0, 128], sizes = [8, 128], strides = [1, 1]} : vector<8x512xf32> to vector<8x128xf32>
    %273 = arith.negf %272 : vector<8x128xf32>
    %274 = math.exp %273 : vector<8x128xf32>
    %cst_79 = arith.constant 1.000000e+00 : f32
    %275 = vector.broadcast %cst_79 : f32 to vector<8x128xf32>
    %276 = arith.addf %275, %274 : vector<8x128xf32>
    %277 = arith.divf %275, %276 : vector<8x128xf32>
    %278 = vector.extract_strided_slice %265 {offsets = [0, 256], sizes = [8, 128], strides = [1, 1]} : vector<8x512xf32> to vector<8x128xf32>
    %279 = math.tanh %278 : vector<8x128xf32>
    %280 = vector.extract_strided_slice %265 {offsets = [0, 384], sizes = [8, 128], strides = [1, 1]} : vector<8x512xf32> to vector<8x128xf32>
    %281 = arith.negf %280 : vector<8x128xf32>
    %282 = math.exp %281 : vector<8x128xf32>
    %cst_80 = arith.constant 1.000000e+00 : f32
    %283 = vector.broadcast %cst_80 : f32 to vector<8x128xf32>
    %284 = arith.addf %283, %282 : vector<8x128xf32>
    %285 = arith.divf %283, %284 : vector<8x128xf32>
    %286 = arith.mulf %277, %252 : vector<8x128xf32>
    %287 = arith.mulf %271, %279 : vector<8x128xf32>
    %288 = arith.addf %286, %287 : vector<8x128xf32>
    %289 = math.tanh %288 : vector<8x128xf32>
    %290 = arith.mulf %285, %289 : vector<8x128xf32>
    %291 = arith.index_cast %260 : i32 to index
    %c0_81 = arith.constant 0 : index
    %c0_82 = arith.constant 0 : index
    %292 = vector.load %arg4[%291, %c0_81, %c0_82] : memref<8x8x128xf32, #tpu.memory_space<vmem>>, vector<1x8x128xf32>
    %293 = vector.shape_cast %292 : vector<1x8x128xf32> to vector<8x128xf32>
    %294 = vector.shape_cast %290 : vector<8x128xf32> to vector<1x8x128xf32>
    tpu.vector_store %arg4[%291, %c0_81, %c0_82], %294 {strides = array<i32>} : memref<8x8x128xf32, #tpu.memory_space<vmem>>, vector<1x8x128xf32>,
    %c0_83 = arith.constant 0 : index
    %c0_84 = arith.constant 0 : index
    %295 = vector.load %arg5[%c0_83, %c0_84] : memref<8x128xf32, #tpu.memory_space<vmem>>, vector<8x128xf32>
    tpu.vector_store %arg5[%c0_83, %c0_84], %290 {strides = array<i32>} : memref<8x128xf32, #tpu.memory_space<vmem>>, vector<8x128xf32>,
    %c0_85 = arith.constant 0 : index
    %c0_86 = arith.constant 0 : index
    %296 = vector.load %arg6[%c0_85, %c0_86] : memref<8x128xf32, #tpu.memory_space<vmem>>, vector<8x128xf32>
    tpu.vector_store %arg6[%c0_85, %c0_86], %288 {strides = array<i32>} : memref<8x128xf32, #tpu.memory_space<vmem>>, vector<8x128xf32>,
    return
  }
  func.func @transform_0(%arg0: i32, %arg1: i32) -> (i32, i32, i32, i32) {
    %c2_i32 = arith.constant 2 : i32
    %0 = arith.muli %c2_i32, %arg1 : i32
    %c0_i32 = arith.constant 0 : i32
    %1 = arith.subi %c0_i32, %0 : i32
    %2 = arith.muli %arg0, %1 : i32
    %3 = arith.addi %arg1, %2 : i32
    %c0_i32_0 = arith.constant 0 : i32
    %c0_i32_1 = arith.constant 0 : i32
    %c0_i32_2 = arith.constant 0 : i32
    return %arg0, %3, %c0_i32_0, %c0_i32_1 : i32, i32, i32, i32
  }
  func.func @transform_1(%arg0: i32, %arg1: i32) -> (i32, i32, i32) {
    %c0_i32 = arith.constant 0 : i32
    %c0_i32_0 = arith.constant 0 : i32
    %c0_i32_1 = arith.constant 0 : i32
    return %arg0, %c0_i32, %c0_i32_0 : i32, i32, i32
  }
  func.func @transform_2(%arg0: i32, %arg1: i32) -> (i32, i32, i32) {
    %c2_i32 = arith.constant 2 : i32
    %0 = arith.muli %c2_i32, %arg1 : i32
    %c0_i32 = arith.constant 0 : i32
    %1 = arith.subi %c0_i32, %0 : i32
    %2 = arith.muli %arg0, %1 : i32
    %3 = arith.addi %arg1, %2 : i32
    %c0_i32_0 = arith.constant 0 : i32
    %c0_i32_1 = arith.constant 0 : i32
    return %3, %c0_i32_0, %arg0 : i32, i32, i32
  }
}

</mosaic_0001>

<llo_original>
// kernel: lstm_forward.2
$region0: #{lstm_forward.2}
  #allocation0 [shape = 'u32[]', space=smem, size = 0x4, offset = 0x4, fixed_abs, tag = 'smem constant byte address 0x4 - core index']
  #allocation1 [shape = 'u32[144,128]{1,0:T(1,128)}', space=vmem, size = 0x12000, scoped, tag = 'internal scratch']
  #allocation2 [shape = 'f32[8,128]{1,0:T(8,128)}', space=vmem, size = 0x1000, scoped, tag = 'scratch operand']
  #allocation3 [shape = 'f32[8,128]{1,0:T(8,128)}', space=vmem, size = 0x1000, scoped, tag = 'scratch operand']
  %s0 = inlined_call_operand.vmem [shape: f32[2,8,8,512], index: 0, kind: input, shape index: {}]
  %s1 = inlined_call_operand.vmem [shape: f32[2,128,512], index: 1, kind: input, shape index: {}]
  %s2 = inlined_call_operand.vmem [shape: f32[8,8,256], index: 2, kind: output, shape index: {}]
  %s3 = sld [smem:[#allocation0]]
  $region79: #{lstm_forward.2} parent=0
    _
  %s5 = ssub.s32 1, %s3
  %s6 = scalar_select 0, %s5, %s3
  $region1: #{lstm_forward.2} parent=0
    #allocation4 [shape = 'u8[65536]{0}', space=vmem, size = 0x10000, scoped, tag = 'output window, operand 0']
    loop: start=0, step=1, limit=4
    $region2: #{lstm_forward.2} parent=1 // loop_pre_header
      _
    $region3: #{lstm_forward.2} parent=1 // loop_header
      %s8 = sphi 0, %s12
      %p9 = scmp.ge.s32.totalorder %s8, 4
      %s15 = sphi 0, %s27
      %s16 = sphi 0, %s23
      %s17 = sphi 0, %s15
      %s18 = sphi 0, %s16
      %s19 = sphi 0, %s17
      %s20 = sphi 0, %s18
      %s40 = sphi 0, %s42
      %s43 = sphi 0, %s40
      %s44 = sphi 0, %s43
      %s60 = sphi 0, %s44
      %s66 = sphi 0, %s68
      %s69 = sphi 0, %s66
      %s70 = sphi 0, %s69
      %s86 = sphi 0, %s70
      %s102 = sphi 0, %s104
      %s105 = sphi 0, %s102
      %s106 = sphi 0, %s105
      %s122 = sphi 0, %s106
    $region4: #{lstm_forward.2} parent=1 // loop_header_branch
      %11 = sbr.rel (%p9) target = $region8
    $region5: #{lstm_forward.2} parent=1 // loop_body
      %s13 = ssub.s32 %s8, 1
      %s14 = ssub.s32 %s8, 2
      %s21 = sadd.s32 1, %s16
      %p22 = scmp.ge.s32.totalorder %s21, 1
      %s23 = scalar_select %p22, 0, %s21
      %s24 = sadd.s32 1, %s15
      %s25 = scalar_select %p22, %s24, %s15
      %p26 = scmp.ge.s32.totalorder %s25, 2
      %s27 = scalar_select %p26, 0, %s25
      %s28 = smul.u32 %s16, 2
      %s29 = ssub.s32 0, %s28
      %s30 = smul.u32 %s15, %s29
      %s31 = sadd.s32 %s16, %s30
      %s32 = smul.u32 %s23, 2
      %s33 = ssub.s32 0, %s32
      %s34 = smul.u32 %s27, %s33
      %s35 = sadd.s32 %s23, %s34
      %s36 = ssub.s32 %s15, %s27
      %s37 = ssub.s32 %s31, %s35
      %s38 = sor.u32 %s36, %s37
      %p39 = scmp.eq.s32.totalorder %s38, 0
      %s41 = sadd.s32 %s40, 1
      %s42 = scalar_select %p39, %s40, %s41
      %p45 = pneg %p39
      %p46 = scmp.eq.s32.totalorder %s8, 1
      %p47 = por %p45, %p46
      %p48 = scmp.ne.s32.totalorder %s40, %s43
      %p49 = scmp.eq.s32.totalorder %s8, 0
      %p50 = por %p48, %p49
      %p51 = scmp.ne.s32.totalorder %s40, %s43
      %p52 = scmp.eq.s32.totalorder %s13, 1
      %p53 = por %p51, %p52
      %p54 = scmp.ne.s32.totalorder %s43, %s44
      %p55 = scmp.eq.s32.totalorder %s13, 0
      %p56 = por %p54, %p55
      %p57 = scmp.ne.s32.totalorder %s43, %s44
      %p58 = scmp.eq.s32.totalorder %s14, 1
      %p59 = por %p57, %p58
      %p61 = scmp.ne.s32.totalorder %s44, %s60
      %p62 = scmp.eq.s32.totalorder %s14, 0
      %p63 = por %p61, %p62
      %s64 = ssub.s32 %s15, %s27
      %p65 = scmp.eq.s32.totalorder %s64, 0
      %s67 = sadd.s32 %s66, 1
      %s68 = scalar_select %p65, %s66, %s67
      %p71 = pneg %p65
      %p72 = scmp.eq.s32.totalorder %s8, 1
      %p73 = por %p71, %p72
      %p74 = scmp.ne.s32.totalorder %s66, %s69
      %p75 = scmp.eq.s32.totalorder %s8, 0
      %p76 = por %p74, %p75
      %p77 = scmp.ne.s32.totalorder %s66, %s69
      %p78 = scmp.eq.s32.totalorder %s13, 1
      %p79 = por %p77, %p78
      %p80 = scmp.ne.s32.totalorder %s69, %s70
      %p81 = scmp.eq.s32.totalorder %s13, 0
      %p82 = por %p80, %p81
      %p83 = scmp.ne.s32.totalorder %s69, %s70
      %p84 = scmp.eq.s32.totalorder %s14, 1
      %p85 = por %p83, %p84
      %p87 = scmp.ne.s32.totalorder %s70, %s86
      %p88 = scmp.eq.s32.totalorder %s14, 0
      %p89 = por %p87, %p88
      %s90 = smul.u32 %s16, 2
      %s91 = ssub.s32 0, %s90
      %s92 = smul.u32 %s15, %s91
      %s93 = sadd.s32 %s16, %s92
      %s94 = smul.u32 %s23, 2
      %s95 = ssub.s32 0, %s94
      %s96 = smul.u32 %s27, %s95
      %s97 = sadd.s32 %s23, %s96
      %s98 = ssub.s32 %s93, %s97
      %s99 = ssub.s32 %s15, %s27
      %s100 = sor.u32 %s98, %s99
      %p101 = scmp.eq.s32.totalorder %s100, 0
      %s103 = sadd.s32 %s102, 1
      %s104 = scalar_select %p101, %s102, %s103
      %p107 = pneg %p101
      %p108 = scmp.eq.s32.totalorder %s8, 1
      %p109 = por %p107, %p108
      %p110 = scmp.ne.s32.totalorder %s102, %s105
      %p111 = scmp.eq.s32.totalorder %s8, 0
      %p112 = por %p110, %p111
      %p113 = scmp.ne.s32.totalorder %s102, %s105
      %p114 = scmp.eq.s32.totalorder %s13, 1
      %p115 = por %p113, %p114
      %p116 = scmp.ne.s32.totalorder %s105, %s106
      %p117 = scmp.eq.s32.totalorder %s13, 0
      %p118 = por %p116, %p117
      %p119 = scmp.ne.s32.totalorder %s105, %s106
      %p120 = scmp.eq.s32.totalorder %s14, 1
      %p121 = por %p119, %p120
      %p123 = scmp.ne.s32.totalorder %s106, %s122
      %p124 = scmp.eq.s32.totalorder %s14, 0
      %p125 = por %p123, %p124
      %p126 = scmp.le.s32.totalorder 1, %s8
      %p127 = scmp.lt.s32.totalorder %s8, 3
      %p128 = pnand %p126, %p127
      %p129 = pneg %p128
      // Predicated region
      $region9: #{lstm_forward.2} parent=5 // pred_check
        _
      $region10: #{lstm_forward.2} parent=5 // pred_check_branch
        %131 = sbr.rel (%p128) target = $region12
      $region11: #{lstm_forward.2} parent=5 // pred_region
        %s132 = ssub.s32 %s8, 1
      $region12: #{lstm_forward.2} parent=5 // pred_fallthru
        _
      %p133 = scmp.lt.s32.totalorder %s8, 2
      // Predicated region
      $region13: #{lstm_forward.2} parent=5 // pred_check
        %p134 = pneg %p133
      $region14: #{lstm_forward.2} parent=5 // pred_check_branch
        %136 = sbr.rel (%p134) target = $region16
      $region15: #{lstm_forward.2} parent=5 // pred_region
        // Predicated region
        $region17: #{lstm_forward.2} parent=15 // pred_check
          %p137 = pneg %p50
        $region18: #{lstm_forward.2} parent=15 // pred_check_branch
          %139 = sbr.rel (%p137) target = $region20
        $region19: #{lstm_forward.2} parent=15 // pred_region
          %s140 = smul.u32 %s16, 2
          %s141 = ssub.s32 0, %s140
          %s142 = smul.u32 %s15, %s141
          %s143 = sadd.s32 %s16, %s142
          %s144 = smul.u32 8, %s143
          %p145 = scmp.lt.s32.totalorder %s15, 1
          %s146 = scalar_select %p145, %s15, 1
          %p147 = scmp.lt.s32.totalorder %s144, 7
          %s148 = scalar_select %p147, %s144, 7
          %s149 = smul.addr %s148, 4
          %s150 = smul.addr %s146, 32
          %s151 = sadd.s32 %s149, %s150
          %s152 = smul.addr %s151, 8
          %s153 = scalar_lea.vmem %s0, %s152
          %s154 = smul.u32 %s16, 2
          %s155 = ssub.s32 0, %s154
          %s156 = smul.u32 %s15, %s155
          %s157 = sadd.s32 %s16, %s156
          %s158 = smul.u32 8, %s157
        $region20: #{lstm_forward.2} parent=15 // pred_fallthru
          _
        // Predicated region
        $region21: #{lstm_forward.2} parent=15 // pred_check
          %p159 = pneg %p76
        $region22: #{lstm_forward.2} parent=15 // pred_check_branch
          %161 = sbr.rel (%p159) target = $region24
        $region23: #{lstm_forward.2} parent=15 // pred_region
          %p162 = scmp.lt.s32.totalorder %s15, 1
          %s163 = scalar_select %p162, %s15, 1
          %s164 = smul.addr %s163, 64
          %s165 = smul.addr %s164, 8
          %s166 = scalar_lea.vmem %s1, %s165
        $region24: #{lstm_forward.2} parent=15 // pred_fallthru
          _
      $region16: #{lstm_forward.2} parent=5 // pred_fallthru
        _
      %p167 = scmp.le.s32.totalorder 1, %s8
      %p168 = scmp.lt.s32.totalorder %s8, 3
      %p169 = pnand %p167, %p168
      %p170 = pneg %p169
      // Predicated region
      $region25: #{lstm_forward.2} parent=5 // pred_check
        _
      $region26: #{lstm_forward.2} parent=5 // pred_check_branch
        %172 = sbr.rel (%p169) target = $region28
      $region27: #{lstm_forward.2} parent=5 // pred_region
        %s173 = ssub.s32 %s8, 1
        %s174 = smul.u32 %s18, 2
        %s175 = ssub.s32 0, %s174
        %s176 = smul.u32 %s17, %s175
        %s177 = sadd.s32 %s18, %s176
        %s178 = smul.u32 8, %s177
        %p179 = scmp.lt.s32.totalorder %s17, 1
        %s180 = scalar_select %p179, %s17, 1
        %p181 = scmp.lt.s32.totalorder %s178, 7
        %s182 = scalar_select %p181, %s178, 7
        %s183 = smul.addr %s182, 4
        %s184 = smul.addr %s180, 32
        %s185 = sadd.s32 %s183, %s184
        %s186 = smul.addr %s185, 8
        %s187 = scalar_lea.vmem %s0, %s186
        %p188 = pneg %p56
        %p189 = pneg %p53
        %p190 = scmp.lt.s32.totalorder %s17, 1
        %s191 = scalar_select %p190, %s17, 1
        %s192 = smul.addr %s191, 64
        %s193 = smul.addr %s192, 8
        %s194 = scalar_lea.vmem %s1, %s193
        %p195 = pneg %p82
        %p196 = pneg %p79
        %p197 = pneg %p118
        %p198 = pneg %p115
        %s199 = sand.u32 %s105, 1
        %s200 = sand.u32 %s105, 1
        %s201 = smul.addr %s200, 64
        %s202 = scalar_lea.vmem [#allocation4], %s201
        %s203 = smul.u32 %s18, 2
        %s204 = ssub.s32 0, %s203
        %s205 = smul.u32 %s17, %s204
        %s206 = sadd.s32 %s18, %s205
        %s207 = smul.u32 8, %s206
        %p208 = scmp.lt.s32.totalorder %s17, 1
        %s209 = scalar_select %p208, %s17, 1
        %p210 = scmp.lt.s32.totalorder %s207, 7
        %s211 = scalar_select %p210, %s207, 7
        %s212 = smul.addr %s211, 4
        %s213 = smul.addr %s209, 32
        %s214 = sadd.s32 %s212, %s213
        %s215 = smul.addr %s214, 8
        %s216 = scalar_lea.vmem %s0, %s215
        %s217 = smul.u32 %s18, 2
        %s218 = ssub.s32 0, %s217
        %s219 = smul.u32 %s17, %s218
        %s220 = sadd.s32 %s18, %s219
        %s221 = smul.u32 8, %s220
        %p222 = scmp.lt.s32.totalorder %s17, 1
        %s223 = scalar_select %p222, %s17, 1
        %s224 = smul.addr %s223, 64
        %s225 = smul.addr %s224, 8
        %s226 = scalar_lea.vmem %s1, %s225
        %s227 = smul.u32 %s18, 2
        %s228 = ssub.s32 0, %s227
        %s229 = smul.u32 %s17, %s228
        %s230 = sadd.s32 %s18, %s229
        %s231 = smul.u32 8, %s230
        %p232 = scmp.eq.s32.totalorder %s18, 0
        // Predicated region
        $region29: #{lstm_forward.2} parent=27 // pred_check
          %p233 = pneg %p232
        $region30: #{lstm_forward.2} parent=27 // pred_check_branch
          %235 = sbr.rel (%p233) target = $region32
        $region31: #{lstm_forward.2} parent=27 // pred_region
          %236 = vst [vmem:[#allocation2] sm:$0xff] 0.0
          %237 = vst [vmem:[#allocation3] sm:$0xff] 0.0
        $region32: #{lstm_forward.2} parent=27 // pred_fallthru
          _
        %v238 = vld [vmem:[%s226] sm:$0xff]
        %v239 = vld [vmem:[%s226 + $0x8] sm:$0xff]
        %v240 = vld [vmem:[%s226 + $0x10] sm:$0xff]
        %v241 = vld [vmem:[%s226 + $0x18] sm:$0xff]
        %v242 = vld [vmem:[%s226 + $0x20] sm:$0xff]
        %v243 = vld [vmem:[%s226 + $0x28] sm:$0xff]
        %v244 = vld [vmem:[%s226 + $0x30] sm:$0xff]
        %v245 = vld [vmem:[%s226 + $0x38] sm:$0xff]
        %v246 = vld [vmem:[%s226 + $0x40] sm:$0xff]
        %v247 = vld [vmem:[%s226 + $0x48] sm:$0xff]
        %v248 = vld [vmem:[%s226 + $0x50] sm:$0xff]
        %v249 = vld [vmem:[%s226 + $0x58] sm:$0xff]
        %v250 = vld [vmem:[%s226 + $0x60] sm:$0xff]
        %v251 = vld [vmem:[%s226 + $0x68] sm:$0xff]
        %v252 = vld [vmem:[%s226 + $0x70] sm:$0xff]
        %v253 = vld [vmem:[%s226 + $0x78] sm:$0xff]
        %v254 = vld [vmem:[%s226 + $0x80] sm:$0xff]
        %v255 = vld [vmem:[%s226 + $0x88] sm:$0xff]
        %v256 = vld [vmem:[%s226 + $0x90] sm:$0xff]
        %v257 = vld [vmem:[%s226 + $0x98] sm:$0xff]
        %v258 = vld [vmem:[%s226 + $0xa0] sm:$0xff]
        %v259 = vld [vmem:[%s226 + $0xa8] sm:$0xff]
        %v260 = vld [vmem:[%s226 + $0xb0] sm:$0xff]
        %v261 = vld [vmem:[%s226 + $0xb8] sm:$0xff]
        %v262 = vld [vmem:[%s226 + $0xc0] sm:$0xff]
        %v263 = vld [vmem:[%s226 + $0xc8] sm:$0xff]
        %v264 = vld [vmem:[%s226 + $0xd0] sm:$0xff]
        %v265 = vld [vmem:[%s226 + $0xd8] sm:$0xff]
        %v266 = vld [vmem:[%s226 + $0xe0] sm:$0xff]
        %v267 = vld [vmem:[%s226 + $0xe8] sm:$0xff]
        %v268 = vld [vmem:[%s226 + $0xf0] sm:$0xff]
        %v269 = vld [vmem:[%s226 + $0xf8] sm:$0xff]
        %v270 = vld [vmem:[%s226 + $0x100] sm:$0xff]
        %v271 = vld [vmem:[%s226 + $0x108] sm:$0xff]
        %v272 = vld [vmem:[%s226 + $0x110] sm:$0xff]
        %v273 = vld [vmem:[%s226 + $0x118] sm:$0xff]
        %v274 = vld [vmem:[%s226 + $0x120] sm:$0xff]
        %v275 = vld [vmem:[%s226 + $0x128] sm:$0xff]
        %v276 = vld [vmem:[%s226 + $0x130] sm:$0xff]
        %v277 = vld [vmem:[%s226 + $0x138] sm:$0xff]
        %v278 = vld [vmem:[%s226 + $0x140] sm:$0xff]
        %v279 = vld [vmem:[%s226 + $0x148] sm:$0xff]
        %v280 = vld [vmem:[%s226 + $0x150] sm:$0xff]
        %v281 = vld [vmem:[%s226 + $0x158] sm:$0xff]
        %v282 = vld [vmem:[%s226 + $0x160] sm:$0xff]
        %v283 = vld [vmem:[%s226 + $0x168] sm:$0xff]
        %v284 = vld [vmem:[%s226 + $0x170] sm:$0xff]
        %v285 = vld [vmem:[%s226 + $0x178] sm:$0xff]
        %v286 = vld [vmem:[%s226 + $0x180] sm:$0xff]
        %v287 = vld [vmem:[%s226 + $0x188] sm:$0xff]
        %v288 = vld [vmem:[%s226 + $0x190] sm:$0xff]
        %v289 = vld [vmem:[%s226 + $0x198] sm:$0xff]
        %v290 = vld [vmem:[%s226 + $0x1a0] sm:$0xff]
        %v291 = vld [vmem:[%s226 + $0x1a8] sm:$0xff]
        %v292 = vld [vmem:[%s226 + $0x1b0] sm:$0xff]
        %v293 = vld [vmem:[%s226 + $0x1b8] sm:$0xff]
        %v294 = vld [vmem:[%s226 + $0x1c0] sm:$0xff]
        %v295 = vld [vmem:[%s226 + $0x1c8] sm:$0xff]
        %v296 = vld [vmem:[%s226 + $0x1d0] sm:$0xff]
        %v297 = vld [vmem:[%s226 + $0x1d8] sm:$0xff]
        %v298 = vld [vmem:[%s226 + $0x1e0] sm:$0xff]
        %v299 = vld [vmem:[%s226 + $0x1e8] sm:$0xff]
        %v300 = vld [vmem:[%s226 + $0x1f0] sm:$0xff]
        %v301 = vld [vmem:[%s226 + $0x1f8] sm:$0xff]
        %v302 = vld [vmem:[#allocation2] sm:$0xff]
        %v303 = vld [vmem:[#allocation3] sm:$0xff]
        %s304 = smul.u32 %s17, 7
        %s305 = smul.u32 %s304, 4
        %s306 = smul.addr %s305, 8
        %s307 = scalar_lea.vmem %s216, %s306
        %v308 = vld [vmem:[%s307] sm:$0xff]
        %v309 = vld [vmem:[%s307 + $0x8] sm:$0xff]
        %v310 = vld [vmem:[%s307 + $0x10] sm:$0xff]
        %v311 = vld [vmem:[%s307 + $0x18] sm:$0xff]
        %312 = vmatprep.subr.mxu0 %v299
        %313 = vmatpush1.msra.mxu0 %v298
        %314 = vmatprep.subr.mxu0 %v295
        %315 = vmatpush1.msra.mxu0 %v294
        %316 = vmatprep.subr.mxu0 %v291
        %317 = vmatpush1.msra.mxu0 %v290
        %318 = vmatprep.subr.mxu0 %v287
        %319 = vmatpush1.msra.mxu0 %v286
        %320 = vmatprep.subr.mxu0 %v283
        %321 = vmatpush1.msra.mxu0 %v282
        %322 = vmatprep.subr.mxu0 %v279
        %323 = vmatpush1.msra.mxu0 %v278
        %324 = vmatprep.subr.mxu0 %v275
        %325 = vmatpush1.msra.mxu0 %v274
        %326 = vmatprep.subr.mxu0 %v271
        %327 = vmatpush1.msra.mxu0 %v270
        %328 = vmatprep.subr.mxu0 %v267
        %329 = vmatpush1.msra.mxu0 %v266
        %330 = vmatprep.subr.mxu0 %v263
        %331 = vmatpush1.msra.mxu0 %v262
        %332 = vmatprep.subr.mxu0 %v259
        %333 = vmatpush1.msra.mxu0 %v258
        %334 = vmatprep.subr.mxu0 %v255
        %335 = vmatpush1.msra.mxu0 %v254
        %336 = vmatprep.subr.mxu0 %v251
        %337 = vmatpush1.msra.mxu0 %v250
        %338 = vmatprep.subr.mxu0 %v247
        %339 = vmatpush1.msra.mxu0 %v246
        %340 = vmatprep.subr.mxu0 %v243
        %341 = vmatpush1.msra.mxu0 %v242
        %342 = vmatprep.subr.mxu0 %v239
        %343 = vmatpush1.msra.mxu0 %v238
        %344 = vmatprep.subr.mxu0 0.0
        %345 = vmatpush2.msra.mxu0 0.0
        %346 = vmatprep.subr.mxu0 0.0
        %347 = vmatpush2.msra.mxu0 0.0
        %348 = vmatprep.subr.mxu0 0.0
        %349 = vmatpush2.msra.mxu0 0.0
        %350 = vmatprep.subr.mxu0 0.0
        %351 = vmatpush2.msra.mxu0 0.0
        %352 = vmatprep.subr.mxu0 0.0
        %353 = vmatpush2.msra.mxu0 0.0
        %354 = vmatprep.subr.mxu0 0.0
        %355 = vmatpush2.msra.mxu0 0.0
        %356 = vmatprep.subr.mxu0 0.0
        %357 = vmatpush2.msra.mxu0 0.0
        %358 = vmatprep.subr.mxu0 0.0
        %359 = vmatpush2.msra.mxu0 0.0
        %360 = vmatprep.subr.mxu0 0.0
        %361 = vmatpush2.msra.mxu0 0.0
        %362 = vmatprep.subr.mxu0 0.0
        %363 = vmatpush2.msra.mxu0 0.0
        %364 = vmatprep.subr.mxu0 0.0
        %365 = vmatpush2.msra.mxu0 0.0
        %366 = vmatprep.subr.mxu0 0.0
        %367 = vmatpush2.msra.mxu0 0.0
        %368 = vmatprep.subr.mxu0 0.0
        %369 = vmatpush2.msra.mxu0 0.0
        %370 = vmatprep.subr.mxu0 0.0
        %371 = vmatpush2.msra.mxu0 0.0
        %372 = vmatprep.subr.mxu0 0.0
        %373 = vmatpush2.msra.mxu0 0.0
        %374 = vmatprep.subr.mxu0 0.0
        %375 = vmatpush2.msra.mxu0 0.0
        %376 = vmatprep.mubr.f32.mxu0 0.0
        %377 = vmatmul.mubr.f32.gmra.mxu0 %v302
        %v378 = vpop.f32.mrf.mxu0
        %v379 = vadd.f32 0.0, %v378
        %v380 = vpop.f32.mrf.mxu0
        %v381 = vadd.f32 0.0, %v380
        %382 = vdwg.mxu0
        %383 = vmatprep.subr.mxu0 %v301
        %384 = vmatpush1.msra.mxu0 %v300
        %385 = vmatprep.subr.mxu0 %v297
        %386 = vmatpush1.msra.mxu0 %v296
        %387 = vmatprep.subr.mxu0 %v293
        %388 = vmatpush1.msra.mxu0 %v292
        %389 = vmatprep.subr.mxu0 %v289
        %390 = vmatpush1.msra.mxu0 %v288
        %391 = vmatprep.subr.mxu0 %v285
        %392 = vmatpush1.msra.mxu0 %v284
        %393 = vmatprep.subr.mxu0 %v281
        %394 = vmatpush1.msra.mxu0 %v280
        %395 = vmatprep.subr.mxu0 %v277
        %396 = vmatpush1.msra.mxu0 %v276
        %397 = vmatprep.subr.mxu0 %v273
        %398 = vmatpush1.msra.mxu0 %v272
        %399 = vmatprep.subr.mxu0 %v269
        %400 = vmatpush1.msra.mxu0 %v268
        %401 = vmatprep.subr.mxu0 %v265
        %402 = vmatpush1.msra.mxu0 %v264
        %403 = vmatprep.subr.mxu0 %v261
        %404 = vmatpush1.msra.mxu0 %v260
        %405 = vmatprep.subr.mxu0 %v257
        %406 = vmatpush1.msra.mxu0 %v256
        %407 = vmatprep.subr.mxu0 %v253
        %408 = vmatpush1.msra.mxu0 %v252
        %409 = vmatprep.subr.mxu0 %v249
        %410 = vmatpush1.msra.mxu0 %v248
        %411 = vmatprep.subr.mxu0 %v245
        %412 = vmatpush1.msra.mxu0 %v244
        %413 = vmatprep.subr.mxu0 %v241
        %414 = vmatpush1.msra.mxu0 %v240
        %415 = vmatprep.subr.mxu0 0.0
        %416 = vmatpush2.msra.mxu0 0.0
        %417 = vmatprep.subr.mxu0 0.0
        %418 = vmatpush2.msra.mxu0 0.0
        %419 = vmatprep.subr.mxu0 0.0
        %420 = vmatpush2.msra.mxu0 0.0
        %421 = vmatprep.subr.mxu0 0.0
        %422 = vmatpush2.msra.mxu0 0.0
        %423 = vmatprep.subr.mxu0 0.0
        %424 = vmatpush2.msra.mxu0 0.0
        %425 = vmatprep.subr.mxu0 0.0
        %426 = vmatpush2.msra.mxu0 0.0
        %427 = vmatprep.subr.mxu0 0.0
        %428 = vmatpush2.msra.mxu0 0.0
        %429 = vmatprep.subr.mxu0 0.0
        %430 = vmatpush2.msra.mxu0 0.0
        %431 = vmatprep.subr.mxu0 0.0
        %432 = vmatpush2.msra.mxu0 0.0
        %433 = vmatprep.subr.mxu0 0.0
        %434 = vmatpush2.msra.mxu0 0.0
        %435 = vmatprep.subr.mxu0 0.0
        %436 = vmatpush2.msra.mxu0 0.0
        %437 = vmatprep.subr.mxu0 0.0
        %438 = vmatpush2.msra.mxu0 0.0
        %439 = vmatprep.subr.mxu0 0.0
        %440 = vmatpush2.msra.mxu0 0.0
        %441 = vmatprep.subr.mxu0 0.0
        %442 = vmatpush2.msra.mxu0 0.0
        %443 = vmatprep.subr.mxu0 0.0
        %444 = vmatpush2.msra.mxu0 0.0
        %445 = vmatprep.subr.mxu0 0.0
        %446 = vmatpush2.msra.mxu0 0.0
        %447 = vmatprep.mubr.f32.mxu0 0.0
        %448 = vmatmul.mubr.f32.gmra.mxu0 %v302
        %v449 = vpop.f32.mrf.mxu0
        %v450 = vadd.f32 0.0, %v449
        %v451 = vpop.f32.mrf.mxu0
        %v452 = vadd.f32 0.0, %v451
        %453 = vdwg.mxu0
        %v454 = vadd.f32 %v308, %v379
        %v455 = vadd.f32 %v309, %v381
        %v456 = vadd.f32 %v310, %v450
        %v457 = vadd.f32 %v311, %v452
        %v458 = vxor.u32 %v454, 2147483648
        %v459 = vmul.f32 %v458, 1.442695
        %v460 = vpow.pop %v459
        %v461 = vadd.f32 %v460, 1.0
        %v462 = vrcp.pop %v461
        %v463 = vmul.f32 1.0, %v462
        %v464 = vxor.u32 %v455, 2147483648
        %v465 = vmul.f32 %v464, 1.442695
        %v466 = vpow.pop %v465
        %v467 = vadd.f32 %v466, 1.0
        %v468 = vrcp.pop %v467
        %v469 = vmul.f32 1.0, %v468
        %v470 = vtanh.pop %v456
        %v471 = vxor.u32 %v457, 2147483648
        %v472 = vmul.f32 %v471, 1.442695
        %v473 = vpow.pop %v472
        %v474 = vadd.f32 %v473, 1.0
        %v475 = vrcp.pop %v474
        %v476 = vmul.f32 1.0, %v475
        %v477 = vmul.f32 %v469, %v303
        %v478 = vmul.f32 %v463, %v470
        %v479 = vadd.f32 %v477, %v478
        %v480 = vtanh.pop %v479
        %v481 = vmul.f32 %v476, %v480
        %s482 = smul.u32 %s304, 8
        %s483 = scalar_lea.vmem %s202, %s482 [#allocation4]
        %484 = vst [vmem:[%s483] sm:$0xff] %v481
        %s485 = smul.u32 %s17, 5
        %s486 = sadd.s32 %s485, 1
        %s487 = smul.u32 %s486, 4
        %s488 = smul.addr %s487, 8
        %s489 = scalar_lea.vmem %s216, %s488
        %v490 = vld [vmem:[%s489] sm:$0xff]
        %v491 = vld [vmem:[%s489 + $0x8] sm:$0xff]
        %v492 = vld [vmem:[%s489 + $0x10] sm:$0xff]
        %v493 = vld [vmem:[%s489 + $0x18] sm:$0xff]
        %494 = vmatprep.subr.mxu0 %v299
        %495 = vmatpush1.msra.mxu0 %v298
        %496 = vmatprep.subr.mxu0 %v295
        %497 = vmatpush1.msra.mxu0 %v294
        %498 = vmatprep.subr.mxu0 %v291
        %499 = vmatpush1.msra.mxu0 %v290
        %500 = vmatprep.subr.mxu0 %v287
        %501 = vmatpush1.msra.mxu0 %v286
        %502 = vmatprep.subr.mxu0 %v283
        %503 = vmatpush1.msra.mxu0 %v282
        %504 = vmatprep.subr.mxu0 %v279
        %505 = vmatpush1.msra.mxu0 %v278
        %506 = vmatprep.subr.mxu0 %v275
        %507 = vmatpush1.msra.mxu0 %v274
        %508 = vmatprep.subr.mxu0 %v271
        %509 = vmatpush1.msra.mxu0 %v270
        %510 = vmatprep.subr.mxu0 %v267
        %511 = vmatpush1.msra.mxu0 %v266
        %512 = vmatprep.subr.mxu0 %v263
        %513 = vmatpush1.msra.mxu0 %v262
        %514 = vmatprep.subr.mxu0 %v259
        %515 = vmatpush1.msra.mxu0 %v258
        %516 = vmatprep.subr.mxu0 %v255
        %517 = vmatpush1.msra.mxu0 %v254
        %518 = vmatprep.subr.mxu0 %v251
        %519 = vmatpush1.msra.mxu0 %v250
        %520 = vmatprep.subr.mxu0 %v247
        %521 = vmatpush1.msra.mxu0 %v246
        %522 = vmatprep.subr.mxu0 %v243
        %523 = vmatpush1.msra.mxu0 %v242
        %524 = vmatprep.subr.mxu0 %v239
        %525 = vmatpush1.msra.mxu0 %v238
        %526 = vmatprep.subr.mxu0 0.0
        %527 = vmatpush2.msra.mxu0 0.0
        %528 = vmatprep.subr.mxu0 0.0
        %529 = vmatpush2.msra.mxu0 0.0
        %530 = vmatprep.subr.mxu0 0.0
        %531 = vmatpush2.msra.mxu0 0.0
        %532 = vmatprep.subr.mxu0 0.0
        %533 = vmatpush2.msra.mxu0 0.0
        %534 = vmatprep.subr.mxu0 0.0
        %535 = vmatpush2.msra.mxu0 0.0
        %536 = vmatprep.subr.mxu0 0.0
        %537 = vmatpush2.msra.mxu0 0.0
        %538 = vmatprep.subr.mxu0 0.0
        %539 = vmatpush2.msra.mxu0 0.0
        %540 = vmatprep.subr.mxu0 0.0
        %541 = vmatpush2.msra.mxu0 0.0
        %542 = vmatprep.subr.mxu0 0.0
        %543 = vmatpush2.msra.mxu0 0.0
        %544 = vmatprep.subr.mxu0 0.0
        %545 = vmatpush2.msra.mxu0 0.0
        %546 = vmatprep.subr.mxu0 0.0
        %547 = vmatpush2.msra.mxu0 0.0
        %548 = vmatprep.subr.mxu0 0.0
        %549 = vmatpush2.msra.mxu0 0.0
        %550 = vmatprep.subr.mxu0 0.0
        %551 = vmatpush2.msra.mxu0 0.0
        %552 = vmatprep.subr.mxu0 0.0
        %553 = vmatpush2.msra.mxu0 0.0
        %554 = vmatprep.subr.mxu0 0.0
        %555 = vmatpush2.msra.mxu0 0.0
        %556 = vmatprep.subr.mxu0 0.0
        %557 = vmatpush2.msra.mxu0 0.0
        %558 = vmatprep.mubr.f32.mxu0 0.0
        %559 = vmatmul.mubr.f32.gmra.mxu0 %v481
        %v560 = vpop.f32.mrf.mxu0
        %v561 = vadd.f32 0.0, %v560
        %v562 = vpop.f32.mrf.mxu0
        %v563 = vadd.f32 0.0, %v562
        %564 = vdwg.mxu0
        %565 = vmatprep.subr.mxu0 %v301
        %566 = vmatpush1.msra.mxu0 %v300
        %567 = vmatprep.subr.mxu0 %v297
        %568 = vmatpush1.msra.mxu0 %v296
        %569 = vmatprep.subr.mxu0 %v293
        %570 = vmatpush1.msra.mxu0 %v292
        %571 = vmatprep.subr.mxu0 %v289
        %572 = vmatpush1.msra.mxu0 %v288
        %573 = vmatprep.subr.mxu0 %v285
        %574 = vmatpush1.msra.mxu0 %v284
        %575 = vmatprep.subr.mxu0 %v281
        %576 = vmatpush1.msra.mxu0 %v280
        %577 = vmatprep.subr.mxu0 %v277
        %578 = vmatpush1.msra.mxu0 %v276
        %579 = vmatprep.subr.mxu0 %v273
        %580 = vmatpush1.msra.mxu0 %v272
        %581 = vmatprep.subr.mxu0 %v269
        %582 = vmatpush1.msra.mxu0 %v268
        %583 = vmatprep.subr.mxu0 %v265
        %584 = vmatpush1.msra.mxu0 %v264
        %585 = vmatprep.subr.mxu0 %v261
        %586 = vmatpush1.msra.mxu0 %v260
        %587 = vmatprep.subr.mxu0 %v257
        %588 = vmatpush1.msra.mxu0 %v256
        %589 = vmatprep.subr.mxu0 %v253
        %590 = vmatpush1.msra.mxu0 %v252
        %591 = vmatprep.subr.mxu0 %v249
        %592 = vmatpush1.msra.mxu0 %v248
        %593 = vmatprep.subr.mxu0 %v245
        %594 = vmatpush1.msra.mxu0 %v244
        %595 = vmatprep.subr.mxu0 %v241
        %596 = vmatpush1.msra.mxu0 %v240
        %597 = vmatprep.subr.mxu0 0.0
        %598 = vmatpush2.msra.mxu0 0.0
        %599 = vmatprep.subr.mxu0 0.0
        %600 = vmatpush2.msra.mxu0 0.0
        %601 = vmatprep.subr.mxu0 0.0
        %602 = vmatpush2.msra.mxu0 0.0
        %603 = vmatprep.subr.mxu0 0.0
        %604 = vmatpush2.msra.mxu0 0.0
        %605 = vmatprep.subr.mxu0 0.0
        %606 = vmatpush2.msra.mxu0 0.0
        %607 = vmatprep.subr.mxu0 0.0
        %608 = vmatpush2.msra.mxu0 0.0
        %609 = vmatprep.subr.mxu0 0.0
        %610 = vmatpush2.msra.mxu0 0.0
        %611 = vmatprep.subr.mxu0 0.0
        %612 = vmatpush2.msra.mxu0 0.0
        %613 = vmatprep.subr.mxu0 0.0
        %614 = vmatpush2.msra.mxu0 0.0
        %615 = vmatprep.subr.mxu0 0.0
        %616 = vmatpush2.msra.mxu0 0.0
        %617 = vmatprep.subr.mxu0 0.0
        %618 = vmatpush2.msra.mxu0 0.0
        %619 = vmatprep.subr.mxu0 0.0
        %620 = vmatpush2.msra.mxu0 0.0
        %621 = vmatprep.subr.mxu0 0.0
        %622 = vmatpush2.msra.mxu0 0.0
        %623 = vmatprep.subr.mxu0 0.0
        %624 = vmatpush2.msra.mxu0 0.0
        %625 = vmatprep.subr.mxu0 0.0
        %626 = vmatpush2.msra.mxu0 0.0
        %627 = vmatprep.subr.mxu0 0.0
        %628 = vmatpush2.msra.mxu0 0.0
        %629 = vmatprep.mubr.f32.mxu0 0.0
        %630 = vmatmul.mubr.f32.gmra.mxu0 %v481
        %v631 = vpop.f32.mrf.mxu0
        %v632 = vadd.f32 0.0, %v631
        %v633 = vpop.f32.mrf.mxu0
        %v634 = vadd.f32 0.0, %v633
        %635 = vdwg.mxu0
        %v636 = vadd.f32 %v490, %v561
        %v637 = vadd.f32 %v491, %v563
        %v638 = vadd.f32 %v492, %v632
        %v639 = vadd.f32 %v493, %v634
        %v640 = vxor.u32 %v636, 2147483648
        %v641 = vmul.f32 %v640, 1.442695
        %v642 = vpow.pop %v641
        %v643 = vadd.f32 %v642, 1.0
        %v644 = vrcp.pop %v643
        %v645 = vmul.f32 1.0, %v644
        %v646 = vxor.u32 %v637, 2147483648
        %v647 = vmul.f32 %v646, 1.442695
        %v648 = vpow.pop %v647
        %v649 = vadd.f32 %v648, 1.0
        %v650 = vrcp.pop %v649
        %v651 = vmul.f32 1.0, %v650
        %v652 = vtanh.pop %v638
        %v653 = vxor.u32 %v639, 2147483648
        %v654 = vmul.f32 %v653, 1.442695
        %v655 = vpow.pop %v654
        %v656 = vadd.f32 %v655, 1.0
        %v657 = vrcp.pop %v656
        %v658 = vmul.f32 1.0, %v657
        %v659 = vmul.f32 %v651, %v479
        %v660 = vmul.f32 %v645, %v652
        %v661 = vadd.f32 %v659, %v660
        %v662 = vtanh.pop %v661
        %v663 = vmul.f32 %v658, %v662
        %s664 = smul.u32 %s486, 8
        %s665 = scalar_lea.vmem %s202, %s664 [#allocation4]
        %666 = vst [vmem:[%s665] sm:$0xff] %v663
        %s667 = smul.u32 %s17, 3
        %s668 = sadd.s32 %s667, 2
        %s669 = smul.u32 %s668, 4
        %s670 = smul.addr %s669, 8
        %s671 = scalar_lea.vmem %s216, %s670
        %v672 = vld [vmem:[%s671] sm:$0xff]
        %v673 = vld [vmem:[%s671 + $0x8] sm:$0xff]
        %v674 = vld [vmem:[%s671 + $0x10] sm:$0xff]
        %v675 = vld [vmem:[%s671 + $0x18] sm:$0xff]
        %676 = vmatprep.subr.mxu0 %v299
        %677 = vmatpush1.msra.mxu0 %v298
        %678 = vmatprep.subr.mxu0 %v295
        %679 = vmatpush1.msra.mxu0 %v294
        %680 = vmatprep.subr.mxu0 %v291
        %681 = vmatpush1.msra.mxu0 %v290
        %682 = vmatprep.subr.mxu0 %v287
        %683 = vmatpush1.msra.mxu0 %v286
        %684 = vmatprep.subr.mxu0 %v283
        %685 = vmatpush1.msra.mxu0 %v282
        %686 = vmatprep.subr.mxu0 %v279
        %687 = vmatpush1.msra.mxu0 %v278
        %688 = vmatprep.subr.mxu0 %v275
        %689 = vmatpush1.msra.mxu0 %v274
        %690 = vmatprep.subr.mxu0 %v271
        %691 = vmatpush1.msra.mxu0 %v270
        %692 = vmatprep.subr.mxu0 %v267
        %693 = vmatpush1.msra.mxu0 %v266
        %694 = vmatprep.subr.mxu0 %v263
        %695 = vmatpush1.msra.mxu0 %v262
        %696 = vmatprep.subr.mxu0 %v259
        %697 = vmatpush1.msra.mxu0 %v258
        %698 = vmatprep.subr.mxu0 %v255
        %699 = vmatpush1.msra.mxu0 %v254
        %700 = vmatprep.subr.mxu0 %v251
        %701 = vmatpush1.msra.mxu0 %v250
        %702 = vmatprep.subr.mxu0 %v247
        %703 = vmatpush1.msra.mxu0 %v246
        %704 = vmatprep.subr.mxu0 %v243
        %705 = vmatpush1.msra.mxu0 %v242
        %706 = vmatprep.subr.mxu0 %v239
        %707 = vmatpush1.msra.mxu0 %v238
        %708 = vmatprep.subr.mxu0 0.0
        %709 = vmatpush2.msra.mxu0 0.0
        %710 = vmatprep.subr.mxu0 0.0
        %711 = vmatpush2.msra.mxu0 0.0
        %712 = vmatprep.subr.mxu0 0.0
        %713 = vmatpush2.msra.mxu0 0.0
        %714 = vmatprep.subr.mxu0 0.0
        %715 = vmatpush2.msra.mxu0 0.0
        %716 = vmatprep.subr.mxu0 0.0
        %717 = vmatpush2.msra.mxu0 0.0
        %718 = vmatprep.subr.mxu0 0.0
        %719 = vmatpush2.msra.mxu0 0.0
        %720 = vmatprep.subr.mxu0 0.0
        %721 = vmatpush2.msra.mxu0 0.0
        %722 = vmatprep.subr.mxu0 0.0
        %723 = vmatpush2.msra.mxu0 0.0
        %724 = vmatprep.subr.mxu0 0.0
        %725 = vmatpush2.msra.mxu0 0.0
        %726 = vmatprep.subr.mxu0 0.0
        %727 = vmatpush2.msra.mxu0 0.0
        %728 = vmatprep.subr.mxu0 0.0
        %729 = vmatpush2.msra.mxu0 0.0
        %730 = vmatprep.subr.mxu0 0.0
        %731 = vmatpush2.msra.mxu0 0.0
        %732 = vmatprep.subr.mxu0 0.0
        %733 = vmatpush2.msra.mxu0 0.0
        %734 = vmatprep.subr.mxu0 0.0
        %735 = vmatpush2.msra.mxu0 0.0
        %736 = vmatprep.subr.mxu0 0.0
        %737 = vmatpush2.msra.mxu0 0.0
        %738 = vmatprep.subr.mxu0 0.0
        %739 = vmatpush2.msra.mxu0 0.0
        %740 = vmatprep.mubr.f32.mxu0 0.0
        %741 = vmatmul.mubr.f32.gmra.mxu0 %v663
        %v742 = vpop.f32.mrf.mxu0
        %v743 = vadd.f32 0.0, %v742
        %v744 = vpop.f32.mrf.mxu0
        %v745 = vadd.f32 0.0, %v744
        %746 = vdwg.mxu0
        %747 = vmatprep.subr.mxu0 %v301
        %748 = vmatpush1.msra.mxu0 %v300
        %749 = vmatprep.subr.mxu0 %v297
        %750 = vmatpush1.msra.mxu0 %v296
        %751 = vmatprep.subr.mxu0 %v293
        %752 = vmatpush1.msra.mxu0 %v292
        %753 = vmatprep.subr.mxu0 %v289
        %754 = vmatpush1.msra.mxu0 %v288
        %755 = vmatprep.subr.mxu0 %v285
        %756 = vmatpush1.msra.mxu0 %v284
        %757 = vmatprep.subr.mxu0 %v281
        %758 = vmatpush1.msra.mxu0 %v280
        %759 = vmatprep.subr.mxu0 %v277
        %760 = vmatpush1.msra.mxu0 %v276
        %761 = vmatprep.subr.mxu0 %v273
        %762 = vmatpush1.msra.mxu0 %v272
        %763 = vmatprep.subr.mxu0 %v269
        %764 = vmatpush1.msra.mxu0 %v268
        %765 = vmatprep.subr.mxu0 %v265
        %766 = vmatpush1.msra.mxu0 %v264
        %767 = vmatprep.subr.mxu0 %v261
        %768 = vmatpush1.msra.mxu0 %v260
        %769 = vmatprep.subr.mxu0 %v257
        %770 = vmatpush1.msra.mxu0 %v256
        %771 = vmatprep.subr.mxu0 %v253
        %772 = vmatpush1.msra.mxu0 %v252
        %773 = vmatprep.subr.mxu0 %v249
        %774 = vmatpush1.msra.mxu0 %v248
        %775 = vmatprep.subr.mxu0 %v245
        %776 = vmatpush1.msra.mxu0 %v244
        %777 = vmatprep.subr.mxu0 %v241
        %778 = vmatpush1.msra.mxu0 %v240
        %779 = vmatprep.subr.mxu0 0.0
        %780 = vmatpush2.msra.mxu0 0.0
        %781 = vmatprep.subr.mxu0 0.0
        %782 = vmatpush2.msra.mxu0 0.0
        %783 = vmatprep.subr.mxu0 0.0
        %784 = vmatpush2.msra.mxu0 0.0
        %785 = vmatprep.subr.mxu0 0.0
        %786 = vmatpush2.msra.mxu0 0.0
        %787 = vmatprep.subr.mxu0 0.0
        %788 = vmatpush2.msra.mxu0 0.0
        %789 = vmatprep.subr.mxu0 0.0
        %790 = vmatpush2.msra.mxu0 0.0
        %791 = vmatprep.subr.mxu0 0.0
        %792 = vmatpush2.msra.mxu0 0.0
        %793 = vmatprep.subr.mxu0 0.0
        %794 = vmatpush2.msra.mxu0 0.0
        %795 = vmatprep.subr.mxu0 0.0
        %796 = vmatpush2.msra.mxu0 0.0
        %797 = vmatprep.subr.mxu0 0.0
        %798 = vmatpush2.msra.mxu0 0.0
        %799 = vmatprep.subr.mxu0 0.0
        %800 = vmatpush2.msra.mxu0 0.0
        %801 = vmatprep.subr.mxu0 0.0
        %802 = vmatpush2.msra.mxu0 0.0
        %803 = vmatprep.subr.mxu0 0.0
        %804 = vmatpush2.msra.mxu0 0.0
        %805 = vmatprep.subr.mxu0 0.0
        %806 = vmatpush2.msra.mxu0 0.0
        %807 = vmatprep.subr.mxu0 0.0
        %808 = vmatpush2.msra.mxu0 0.0
        %809 = vmatprep.subr.mxu0 0.0
        %810 = vmatpush2.msra.mxu0 0.0
        %811 = vmatprep.mubr.f32.mxu0 0.0
        %812 = vmatmul.mubr.f32.gmra.mxu0 %v663
        %v813 = vpop.f32.mrf.mxu0
        %v814 = vadd.f32 0.0, %v813
        %v815 = vpop.f32.mrf.mxu0
        %v816 = vadd.f32 0.0, %v815
        %817 = vdwg.mxu0
        %v818 = vadd.f32 %v672, %v743
        %v819 = vadd.f32 %v673, %v745
        %v820 = vadd.f32 %v674, %v814
        %v821 = vadd.f32 %v675, %v816
        %v822 = vxor.u32 %v818, 2147483648
        %v823 = vmul.f32 %v822, 1.442695
        %v824 = vpow.pop %v823
        %v825 = vadd.f32 %v824, 1.0
        %v826 = vrcp.pop %v825
        %v827 = vmul.f32 1.0, %v826
        %v828 = vxor.u32 %v819, 2147483648
        %v829 = vmul.f32 %v828, 1.442695
        %v830 = vpow.pop %v829
        %v831 = vadd.f32 %v830, 1.0
        %v832 = vrcp.pop %v831
        %v833 = vmul.f32 1.0, %v832
        %v834 = vtanh.pop %v820
        %v835 = vxor.u32 %v821, 2147483648
        %v836 = vmul.f32 %v835, 1.442695
        %v837 = vpow.pop %v836
        %v838 = vadd.f32 %v837, 1.0
        %v839 = vrcp.pop %v838
        %v840 = vmul.f32 1.0, %v839
        %v841 = vmul.f32 %v833, %v661
        %v842 = vmul.f32 %v827, %v834
        %v843 = vadd.f32 %v841, %v842
        %v844 = vtanh.pop %v843
        %v845 = vmul.f32 %v840, %v844
        %s846 = smul.u32 %s668, 8
        %s847 = scalar_lea.vmem %s202, %s846 [#allocation4]
        %848 = vst [vmem:[%s847] sm:$0xff] %v845
        %s849 = sadd.s32 %s17, 3
        %s850 = smul.u32 %s849, 4
        %s851 = smul.addr %s850, 8
        %s852 = scalar_lea.vmem %s216, %s851
        %v853 = vld [vmem:[%s852] sm:$0xff]
        %v854 = vld [vmem:[%s852 + $0x8] sm:$0xff]
        %v855 = vld [vmem:[%s852 + $0x10] sm:$0xff]
        %v856 = vld [vmem:[%s852 + $0x18] sm:$0xff]
        %857 = vmatprep.subr.mxu0 %v299
        %858 = vmatpush1.msra.mxu0 %v298
        %859 = vmatprep.subr.mxu0 %v295
        %860 = vmatpush1.msra.mxu0 %v294
        %861 = vmatprep.subr.mxu0 %v291
        %862 = vmatpush1.msra.mxu0 %v290
        %863 = vmatprep.subr.mxu0 %v287
        %864 = vmatpush1.msra.mxu0 %v286
        %865 = vmatprep.subr.mxu0 %v283
        %866 = vmatpush1.msra.mxu0 %v282
        %867 = vmatprep.subr.mxu0 %v279
        %868 = vmatpush1.msra.mxu0 %v278
        %869 = vmatprep.subr.mxu0 %v275
        %870 = vmatpush1.msra.mxu0 %v274
        %871 = vmatprep.subr.mxu0 %v271
        %872 = vmatpush1.msra.mxu0 %v270
        %873 = vmatprep.subr.mxu0 %v267
        %874 = vmatpush1.msra.mxu0 %v266
        %875 = vmatprep.subr.mxu0 %v263
        %876 = vmatpush1.msra.mxu0 %v262
        %877 = vmatprep.subr.mxu0 %v259
        %878 = vmatpush1.msra.mxu0 %v258
        %879 = vmatprep.subr.mxu0 %v255
        %880 = vmatpush1.msra.mxu0 %v254
        %881 = vmatprep.subr.mxu0 %v251
        %882 = vmatpush1.msra.mxu0 %v250
        %883 = vmatprep.subr.mxu0 %v247
        %884 = vmatpush1.msra.mxu0 %v246
        %885 = vmatprep.subr.mxu0 %v243
        %886 = vmatpush1.msra.mxu0 %v242
        %887 = vmatprep.subr.mxu0 %v239
        %888 = vmatpush1.msra.mxu0 %v238
        %889 = vmatprep.subr.mxu0 0.0
        %890 = vmatpush2.msra.mxu0 0.0
        %891 = vmatprep.subr.mxu0 0.0
        %892 = vmatpush2.msra.mxu0 0.0
        %893 = vmatprep.subr.mxu0 0.0
        %894 = vmatpush2.msra.mxu0 0.0
        %895 = vmatprep.subr.mxu0 0.0
        %896 = vmatpush2.msra.mxu0 0.0
        %897 = vmatprep.subr.mxu0 0.0
        %898 = vmatpush2.msra.mxu0 0.0
        %899 = vmatprep.subr.mxu0 0.0
        %900 = vmatpush2.msra.mxu0 0.0
        %901 = vmatprep.subr.mxu0 0.0
        %902 = vmatpush2.msra.mxu0 0.0
        %903 = vmatprep.subr.mxu0 0.0
        %904 = vmatpush2.msra.mxu0 0.0
        %905 = vmatprep.subr.mxu0 0.0
        %906 = vmatpush2.msra.mxu0 0.0
        %907 = vmatprep.subr.mxu0 0.0
        %908 = vmatpush2.msra.mxu0 0.0
        %909 = vmatprep.subr.mxu0 0.0
        %910 = vmatpush2.msra.mxu0 0.0
        %911 = vmatprep.subr.mxu0 0.0
        %912 = vmatpush2.msra.mxu0 0.0
        %913 = vmatprep.subr.mxu0 0.0
        %914 = vmatpush2.msra.mxu0 0.0
        %915 = vmatprep.subr.mxu0 0.0
        %916 = vmatpush2.msra.mxu0 0.0
        %917 = vmatprep.subr.mxu0 0.0
        %918 = vmatpush2.msra.mxu0 0.0
        %919 = vmatprep.subr.mxu0 0.0
        %920 = vmatpush2.msra.mxu0 0.0
        %921 = vmatprep.mubr.f32.mxu0 0.0
        %922 = vmatmul.mubr.f32.gmra.mxu0 %v845
        %v923 = vpop.f32.mrf.mxu0
        %v924 = vadd.f32 0.0, %v923
        %v925 = vpop.f32.mrf.mxu0
        %v926 = vadd.f32 0.0, %v925
        %927 = vdwg.mxu0
        %928 = vmatprep.subr.mxu0 %v301
        %929 = vmatpush1.msra.mxu0 %v300
        %930 = vmatprep.subr.mxu0 %v297
        %931 = vmatpush1.msra.mxu0 %v296
        %932 = vmatprep.subr.mxu0 %v293
        %933 = vmatpush1.msra.mxu0 %v292
        %934 = vmatprep.subr.mxu0 %v289
        %935 = vmatpush1.msra.mxu0 %v288
        %936 = vmatprep.subr.mxu0 %v285
        %937 = vmatpush1.msra.mxu0 %v284
        %938 = vmatprep.subr.mxu0 %v281
        %939 = vmatpush1.msra.mxu0 %v280
        %940 = vmatprep.subr.mxu0 %v277
        %941 = vmatpush1.msra.mxu0 %v276
        %942 = vmatprep.subr.mxu0 %v273
        %943 = vmatpush1.msra.mxu0 %v272
        %944 = vmatprep.subr.mxu0 %v269
        %945 = vmatpush1.msra.mxu0 %v268
        %946 = vmatprep.subr.mxu0 %v265
        %947 = vmatpush1.msra.mxu0 %v264
        %948 = vmatprep.subr.mxu0 %v261
        %949 = vmatpush1.msra.mxu0 %v260
        %950 = vmatprep.subr.mxu0 %v257
        %951 = vmatpush1.msra.mxu0 %v256
        %952 = vmatprep.subr.mxu0 %v253
        %953 = vmatpush1.msra.mxu0 %v252
        %954 = vmatprep.subr.mxu0 %v249
        %955 = vmatpush1.msra.mxu0 %v248
        %956 = vmatprep.subr.mxu0 %v245
        %957 = vmatpush1.msra.mxu0 %v244
        %958 = vmatprep.subr.mxu0 %v241
        %959 = vmatpush1.msra.mxu0 %v240
        %960 = vmatprep.subr.mxu0 0.0
        %961 = vmatpush2.msra.mxu0 0.0
        %962 = vmatprep.subr.mxu0 0.0
        %963 = vmatpush2.msra.mxu0 0.0
        %964 = vmatprep.subr.mxu0 0.0
        %965 = vmatpush2.msra.mxu0 0.0
        %966 = vmatprep.subr.mxu0 0.0
        %967 = vmatpush2.msra.mxu0 0.0
        %968 = vmatprep.subr.mxu0 0.0
        %969 = vmatpush2.msra.mxu0 0.0
        %970 = vmatprep.subr.mxu0 0.0
        %971 = vmatpush2.msra.mxu0 0.0
        %972 = vmatprep.subr.mxu0 0.0
        %973 = vmatpush2.msra.mxu0 0.0
        %974 = vmatprep.subr.mxu0 0.0
        %975 = vmatpush2.msra.mxu0 0.0
        %976 = vmatprep.subr.mxu0 0.0
        %977 = vmatpush2.msra.mxu0 0.0
        %978 = vmatprep.subr.mxu0 0.0
        %979 = vmatpush2.msra.mxu0 0.0
        %980 = vmatprep.subr.mxu0 0.0
        %981 = vmatpush2.msra.mxu0 0.0
        %982 = vmatprep.subr.mxu0 0.0
        %983 = vmatpush2.msra.mxu0 0.0
        %984 = vmatprep.subr.mxu0 0.0
        %985 = vmatpush2.msra.mxu0 0.0
        %986 = vmatprep.subr.mxu0 0.0
        %987 = vmatpush2.msra.mxu0 0.0
        %988 = vmatprep.subr.mxu0 0.0
        %989 = vmatpush2.msra.mxu0 0.0
        %990 = vmatprep.subr.mxu0 0.0
        %991 = vmatpush2.msra.mxu0 0.0
        %992 = vmatprep.mubr.f32.mxu0 0.0
        %993 = vmatmul.mubr.f32.gmra.mxu0 %v845
        %v994 = vpop.f32.mrf.mxu0
        %v995 = vadd.f32 0.0, %v994
        %v996 = vpop.f32.mrf.mxu0
        %v997 = vadd.f32 0.0, %v996
        %998 = vdwg.mxu0
        %v999 = vadd.f32 %v853, %v924
        %v1000 = vadd.f32 %v854, %v926
        %v1001 = vadd.f32 %v855, %v995
        %v1002 = vadd.f32 %v856, %v997
        %v1003 = vxor.u32 %v999, 2147483648
        %v1004 = vmul.f32 %v1003, 1.442695
        %v1005 = vpow.pop %v1004
        %v1006 = vadd.f32 %v1005, 1.0
        %v1007 = vrcp.pop %v1006
        %v1008 = vmul.f32 1.0, %v1007
        %v1009 = vxor.u32 %v1000, 2147483648
        %v1010 = vmul.f32 %v1009, 1.442695
        %v1011 = vpow.pop %v1010
        %v1012 = vadd.f32 %v1011, 1.0
        %v1013 = vrcp.pop %v1012
        %v1014 = vmul.f32 1.0, %v1013
        %v1015 = vtanh.pop %v1001
        %v1016 = vxor.u32 %v1002, 2147483648
        %v1017 = vmul.f32 %v1016, 1.442695
        %v1018 = vpow.pop %v1017
        %v1019 = vadd.f32 %v1018, 1.0
        %v1020 = vrcp.pop %v1019
        %v1021 = vmul.f32 1.0, %v1020
        %v1022 = vmul.f32 %v1014, %v843
        %v1023 = vmul.f32 %v1008, %v1015
        %v1024 = vadd.f32 %v1022, %v1023
        %v1025 = vtanh.pop %v1024
        %v1026 = vmul.f32 %v1021, %v1025
        %s1027 = smul.u32 %s849, 8
        %s1028 = scalar_lea.vmem %s202, %s1027 [#allocation4]
        %1029 = vst [vmem:[%s1028] sm:$0xff] %v1026
        %s1030 = ssub.s32 4, %s17
        %s1031 = smul.u32 %s1030, 4
        %s1032 = smul.addr %s1031, 8
        %s1033 = scalar_lea.vmem %s216, %s1032
        %v1034 = vld [vmem:[%s1033] sm:$0xff]
        %v1035 = vld [vmem:[%s1033 + $0x8] sm:$0xff]
        %v1036 = vld [vmem:[%s1033 + $0x10] sm:$0xff]
        %v1037 = vld [vmem:[%s1033 + $0x18] sm:$0xff]
        %1038 = vmatprep.subr.mxu0 %v299
        %1039 = vmatpush1.msra.mxu0 %v298
        %1040 = vmatprep.subr.mxu0 %v295
        %1041 = vmatpush1.msra.mxu0 %v294
        %1042 = vmatprep.subr.mxu0 %v291
        %1043 = vmatpush1.msra.mxu0 %v290
        %1044 = vmatprep.subr.mxu0 %v287
        %1045 = vmatpush1.msra.mxu0 %v286
        %1046 = vmatprep.subr.mxu0 %v283
        %1047 = vmatpush1.msra.mxu0 %v282
        %1048 = vmatprep.subr.mxu0 %v279
        %1049 = vmatpush1.msra.mxu0 %v278
        %1050 = vmatprep.subr.mxu0 %v275
        %1051 = vmatpush1.msra.mxu0 %v274
        %1052 = vmatprep.subr.mxu0 %v271
        %1053 = vmatpush1.msra.mxu0 %v270
        %1054 = vmatprep.subr.mxu0 %v267
        %1055 = vmatpush1.msra.mxu0 %v266
        %1056 = vmatprep.subr.mxu0 %v263
        %1057 = vmatpush1.msra.mxu0 %v262
        %1058 = vmatprep.subr.mxu0 %v259
        %1059 = vmatpush1.msra.mxu0 %v258
        %1060 = vmatprep.subr.mxu0 %v255
        %1061 = vmatpush1.msra.mxu0 %v254
        %1062 = vmatprep.subr.mxu0 %v251
        %1063 = vmatpush1.msra.mxu0 %v250
        %1064 = vmatprep.subr.mxu0 %v247
        %1065 = vmatpush1.msra.mxu0 %v246
        %1066 = vmatprep.subr.mxu0 %v243
        %1067 = vmatpush1.msra.mxu0 %v242
        %1068 = vmatprep.subr.mxu0 %v239
        %1069 = vmatpush1.msra.mxu0 %v238
        %1070 = vmatprep.subr.mxu0 0.0
        %1071 = vmatpush2.msra.mxu0 0.0
        %1072 = vmatprep.subr.mxu0 0.0
        %1073 = vmatpush2.msra.mxu0 0.0
        %1074 = vmatprep.subr.mxu0 0.0
        %1075 = vmatpush2.msra.mxu0 0.0
        %1076 = vmatprep.subr.mxu0 0.0
        %1077 = vmatpush2.msra.mxu0 0.0
        %1078 = vmatprep.subr.mxu0 0.0
        %1079 = vmatpush2.msra.mxu0 0.0
        %1080 = vmatprep.subr.mxu0 0.0
        %1081 = vmatpush2.msra.mxu0 0.0
        %1082 = vmatprep.subr.mxu0 0.0
        %1083 = vmatpush2.msra.mxu0 0.0
        %1084 = vmatprep.subr.mxu0 0.0
        %1085 = vmatpush2.msra.mxu0 0.0
        %1086 = vmatprep.subr.mxu0 0.0
        %1087 = vmatpush2.msra.mxu0 0.0
        %1088 = vmatprep.subr.mxu0 0.0
        %1089 = vmatpush2.msra.mxu0 0.0
        %1090 = vmatprep.subr.mxu0 0.0
        %1091 = vmatpush2.msra.mxu0 0.0
        %1092 = vmatprep.subr.mxu0 0.0
        %1093 = vmatpush2.msra.mxu0 0.0
        %1094 = vmatprep.subr.mxu0 0.0
        %1095 = vmatpush2.msra.mxu0 0.0
        %1096 = vmatprep.subr.mxu0 0.0
        %1097 = vmatpush2.msra.mxu0 0.0
        %1098 = vmatprep.subr.mxu0 0.0
        %1099 = vmatpush2.msra.mxu0 0.0
        %1100 = vmatprep.subr.mxu0 0.0
        %1101 = vmatpush2.msra.mxu0 0.0
        %1102 = vmatprep.mubr.f32.mxu0 0.0
        %1103 = vmatmul.mubr.f32.gmra.mxu0 %v1026
        %v1104 = vpop.f32.mrf.mxu0
        %v1105 = vadd.f32 0.0, %v1104
        %v1106 = vpop.f32.mrf.mxu0
        %v1107 = vadd.f32 0.0, %v1106
        %1108 = vdwg.mxu0
        %1109 = vmatprep.subr.mxu0 %v301
        %1110 = vmatpush1.msra.mxu0 %v300
        %1111 = vmatprep.subr.mxu0 %v297
        %1112 = vmatpush1.msra.mxu0 %v296
        %1113 = vmatprep.subr.mxu0 %v293
        %1114 = vmatpush1.msra.mxu0 %v292
        %1115 = vmatprep.subr.mxu0 %v289
        %1116 = vmatpush1.msra.mxu0 %v288
        %1117 = vmatprep.subr.mxu0 %v285
        %1118 = vmatpush1.msra.mxu0 %v284
        %1119 = vmatprep.subr.mxu0 %v281
        %1120 = vmatpush1.msra.mxu0 %v280
        %1121 = vmatprep.subr.mxu0 %v277
        %1122 = vmatpush1.msra.mxu0 %v276
        %1123 = vmatprep.subr.mxu0 %v273
        %1124 = vmatpush1.msra.mxu0 %v272
        %1125 = vmatprep.subr.mxu0 %v269
        %1126 = vmatpush1.msra.mxu0 %v268
        %1127 = vmatprep.subr.mxu0 %v265
        %1128 = vmatpush1.msra.mxu0 %v264
        %1129 = vmatprep.subr.mxu0 %v261
        %1130 = vmatpush1.msra.mxu0 %v260
        %1131 = vmatprep.subr.mxu0 %v257
        %1132 = vmatpush1.msra.mxu0 %v256
        %1133 = vmatprep.subr.mxu0 %v253
        %1134 = vmatpush1.msra.mxu0 %v252
        %1135 = vmatprep.subr.mxu0 %v249
        %1136 = vmatpush1.msra.mxu0 %v248
        %1137 = vmatprep.subr.mxu0 %v245
        %1138 = vmatpush1.msra.mxu0 %v244
        %1139 = vmatprep.subr.mxu0 %v241
        %1140 = vmatpush1.msra.mxu0 %v240
        %1141 = vmatprep.subr.mxu0 0.0
        %1142 = vmatpush2.msra.mxu0 0.0
        %1143 = vmatprep.subr.mxu0 0.0
        %1144 = vmatpush2.msra.mxu0 0.0
        %1145 = vmatprep.subr.mxu0 0.0
        %1146 = vmatpush2.msra.mxu0 0.0
        %1147 = vmatprep.subr.mxu0 0.0
        %1148 = vmatpush2.msra.mxu0 0.0
        %1149 = vmatprep.subr.mxu0 0.0
        %1150 = vmatpush2.msra.mxu0 0.0
        %1151 = vmatprep.subr.mxu0 0.0
        %1152 = vmatpush2.msra.mxu0 0.0
        %1153 = vmatprep.subr.mxu0 0.0
        %1154 = vmatpush2.msra.mxu0 0.0
        %1155 = vmatprep.subr.mxu0 0.0
        %1156 = vmatpush2.msra.mxu0 0.0
        %1157 = vmatprep.subr.mxu0 0.0
        %1158 = vmatpush2.msra.mxu0 0.0
        %1159 = vmatprep.subr.mxu0 0.0
        %1160 = vmatpush2.msra.mxu0 0.0
        %1161 = vmatprep.subr.mxu0 0.0
        %1162 = vmatpush2.msra.mxu0 0.0
        %1163 = vmatprep.subr.mxu0 0.0
        %1164 = vmatpush2.msra.mxu0 0.0
        %1165 = vmatprep.subr.mxu0 0.0
        %1166 = vmatpush2.msra.mxu0 0.0
        %1167 = vmatprep.subr.mxu0 0.0
        %1168 = vmatpush2.msra.mxu0 0.0
        %1169 = vmatprep.subr.mxu0 0.0
        %1170 = vmatpush2.msra.mxu0 0.0
        %1171 = vmatprep.subr.mxu0 0.0
        %1172 = vmatpush2.msra.mxu0 0.0
        %1173 = vmatprep.mubr.f32.mxu0 0.0
        %1174 = vmatmul.mubr.f32.gmra.mxu0 %v1026
        %v1175 = vpop.f32.mrf.mxu0
        %v1176 = vadd.f32 0.0, %v1175
        %v1177 = vpop.f32.mrf.mxu0
        %v1178 = vadd.f32 0.0, %v1177
        %1179 = vdwg.mxu0
        %v1180 = vadd.f32 %v1034, %v1105
        %v1181 = vadd.f32 %v1035, %v1107
        %v1182 = vadd.f32 %v1036, %v1176
        %v1183 = vadd.f32 %v1037, %v1178
        %v1184 = vxor.u32 %v1180, 2147483648
        %v1185 = vmul.f32 %v1184, 1.442695
        %v1186 = vpow.pop %v1185
        %v1187 = vadd.f32 %v1186, 1.0
        %v1188 = vrcp.pop %v1187
        %v1189 = vmul.f32 1.0, %v1188
        %v1190 = vxor.u32 %v1181, 2147483648
        %v1191 = vmul.f32 %v1190, 1.442695
        %v1192 = vpow.pop %v1191
        %v1193 = vadd.f32 %v1192, 1.0
        %v1194 = vrcp.pop %v1193
        %v1195 = vmul.f32 1.0, %v1194
        %v1196 = vtanh.pop %v1182
        %v1197 = vxor.u32 %v1183, 2147483648
        %v1198 = vmul.f32 %v1197, 1.442695
        %v1199 = vpow.pop %v1198
        %v1200 = vadd.f32 %v1199, 1.0
        %v1201 = vrcp.pop %v1200
        %v1202 = vmul.f32 1.0, %v1201
        %v1203 = vmul.f32 %v1195, %v1024
        %v1204 = vmul.f32 %v1189, %v1196
        %v1205 = vadd.f32 %v1203, %v1204
        %v1206 = vtanh.pop %v1205
        %v1207 = vmul.f32 %v1202, %v1206
        %s1208 = smul.u32 %s1030, 8
        %s1209 = scalar_lea.vmem %s202, %s1208 [#allocation4]
        %1210 = vst [vmem:[%s1209] sm:$0xff] %v1207
        %s1211 = smul.u32 %s17, 4294967293
        %s1212 = sadd.s32 %s1211, 5
        %s1213 = smul.u32 %s1212, 4
        %s1214 = smul.addr %s1213, 8
        %s1215 = scalar_lea.vmem %s216, %s1214
        %v1216 = vld [vmem:[%s1215] sm:$0xff]
        %v1217 = vld [vmem:[%s1215 + $0x8] sm:$0xff]
        %v1218 = vld [vmem:[%s1215 + $0x10] sm:$0xff]
        %v1219 = vld [vmem:[%s1215 + $0x18] sm:$0xff]
        %1220 = vmatprep.subr.mxu0 %v299
        %1221 = vmatpush1.msra.mxu0 %v298
        %1222 = vmatprep.subr.mxu0 %v295
        %1223 = vmatpush1.msra.mxu0 %v294
        %1224 = vmatprep.subr.mxu0 %v291
        %1225 = vmatpush1.msra.mxu0 %v290
        %1226 = vmatprep.subr.mxu0 %v287
        %1227 = vmatpush1.msra.mxu0 %v286
        %1228 = vmatprep.subr.mxu0 %v283
        %1229 = vmatpush1.msra.mxu0 %v282
        %1230 = vmatprep.subr.mxu0 %v279
        %1231 = vmatpush1.msra.mxu0 %v278
        %1232 = vmatprep.subr.mxu0 %v275
        %1233 = vmatpush1.msra.mxu0 %v274
        %1234 = vmatprep.subr.mxu0 %v271
        %1235 = vmatpush1.msra.mxu0 %v270
        %1236 = vmatprep.subr.mxu0 %v267
        %1237 = vmatpush1.msra.mxu0 %v266
        %1238 = vmatprep.subr.mxu0 %v263
        %1239 = vmatpush1.msra.mxu0 %v262
        %1240 = vmatprep.subr.mxu0 %v259
        %1241 = vmatpush1.msra.mxu0 %v258
        %1242 = vmatprep.subr.mxu0 %v255
        %1243 = vmatpush1.msra.mxu0 %v254
        %1244 = vmatprep.subr.mxu0 %v251
        %1245 = vmatpush1.msra.mxu0 %v250
        %1246 = vmatprep.subr.mxu0 %v247
        %1247 = vmatpush1.msra.mxu0 %v246
        %1248 = vmatprep.subr.mxu0 %v243
        %1249 = vmatpush1.msra.mxu0 %v242
        %1250 = vmatprep.subr.mxu0 %v239
        %1251 = vmatpush1.msra.mxu0 %v238
        %1252 = vmatprep.subr.mxu0 0.0
        %1253 = vmatpush2.msra.mxu0 0.0
        %1254 = vmatprep.subr.mxu0 0.0
        %1255 = vmatpush2.msra.mxu0 0.0
        %1256 = vmatprep.subr.mxu0 0.0
        %1257 = vmatpush2.msra.mxu0 0.0
        %1258 = vmatprep.subr.mxu0 0.0
        %1259 = vmatpush2.msra.mxu0 0.0
        %1260 = vmatprep.subr.mxu0 0.0
        %1261 = vmatpush2.msra.mxu0 0.0
        %1262 = vmatprep.subr.mxu0 0.0
        %1263 = vmatpush2.msra.mxu0 0.0
        %1264 = vmatprep.subr.mxu0 0.0
        %1265 = vmatpush2.msra.mxu0 0.0
        %1266 = vmatprep.subr.mxu0 0.0
        %1267 = vmatpush2.msra.mxu0 0.0
        %1268 = vmatprep.subr.mxu0 0.0
        %1269 = vmatpush2.msra.mxu0 0.0
        %1270 = vmatprep.subr.mxu0 0.0
        %1271 = vmatpush2.msra.mxu0 0.0
        %1272 = vmatprep.subr.mxu0 0.0
        %1273 = vmatpush2.msra.mxu0 0.0
        %1274 = vmatprep.subr.mxu0 0.0
        %1275 = vmatpush2.msra.mxu0 0.0
        %1276 = vmatprep.subr.mxu0 0.0
        %1277 = vmatpush2.msra.mxu0 0.0
        %1278 = vmatprep.subr.mxu0 0.0
        %1279 = vmatpush2.msra.mxu0 0.0
        %1280 = vmatprep.subr.mxu0 0.0
        %1281 = vmatpush2.msra.mxu0 0.0
        %1282 = vmatprep.subr.mxu0 0.0
        %1283 = vmatpush2.msra.mxu0 0.0
        %1284 = vmatprep.mubr.f32.mxu0 0.0
        %1285 = vmatmul.mubr.f32.gmra.mxu0 %v1207
        %v1286 = vpop.f32.mrf.mxu0
        %v1287 = vadd.f32 0.0, %v1286
        %v1288 = vpop.f32.mrf.mxu0
        %v1289 = vadd.f32 0.0, %v1288
        %1290 = vdwg.mxu0
        %1291 = vmatprep.subr.mxu0 %v301
        %1292 = vmatpush1.msra.mxu0 %v300
        %1293 = vmatprep.subr.mxu0 %v297
        %1294 = vmatpush1.msra.mxu0 %v296
        %1295 = vmatprep.subr.mxu0 %v293
        %1296 = vmatpush1.msra.mxu0 %v292
        %1297 = vmatprep.subr.mxu0 %v289
        %1298 = vmatpush1.msra.mxu0 %v288
        %1299 = vmatprep.subr.mxu0 %v285
        %1300 = vmatpush1.msra.mxu0 %v284
        %1301 = vmatprep.subr.mxu0 %v281
        %1302 = vmatpush1.msra.mxu0 %v280
        %1303 = vmatprep.subr.mxu0 %v277
        %1304 = vmatpush1.msra.mxu0 %v276
        %1305 = vmatprep.subr.mxu0 %v273
        %1306 = vmatpush1.msra.mxu0 %v272
        %1307 = vmatprep.subr.mxu0 %v269
        %1308 = vmatpush1.msra.mxu0 %v268
        %1309 = vmatprep.subr.mxu0 %v265
        %1310 = vmatpush1.msra.mxu0 %v264
        %1311 = vmatprep.subr.mxu0 %v261
        %1312 = vmatpush1.msra.mxu0 %v260
        %1313 = vmatprep.subr.mxu0 %v257
        %1314 = vmatpush1.msra.mxu0 %v256
        %1315 = vmatprep.subr.mxu0 %v253
        %1316 = vmatpush1.msra.mxu0 %v252
        %1317 = vmatprep.subr.mxu0 %v249
        %1318 = vmatpush1.msra.mxu0 %v248
        %1319 = vmatprep.subr.mxu0 %v245
        %1320 = vmatpush1.msra.mxu0 %v244
        %1321 = vmatprep.subr.mxu0 %v241
        %1322 = vmatpush1.msra.mxu0 %v240
        %1323 = vmatprep.subr.mxu0 0.0
        %1324 = vmatpush2.msra.mxu0 0.0
        %1325 = vmatprep.subr.mxu0 0.0
        %1326 = vmatpush2.msra.mxu0 0.0
        %1327 = vmatprep.subr.mxu0 0.0
        %1328 = vmatpush2.msra.mxu0 0.0
        %1329 = vmatprep.subr.mxu0 0.0
        %1330 = vmatpush2.msra.mxu0 0.0
        %1331 = vmatprep.subr.mxu0 0.0
        %1332 = vmatpush2.msra.mxu0 0.0
        %1333 = vmatprep.subr.mxu0 0.0
        %1334 = vmatpush2.msra.mxu0 0.0
        %1335 = vmatprep.subr.mxu0 0.0
        %1336 = vmatpush2.msra.mxu0 0.0
        %1337 = vmatprep.subr.mxu0 0.0
        %1338 = vmatpush2.msra.mxu0 0.0
        %1339 = vmatprep.subr.mxu0 0.0
        %1340 = vmatpush2.msra.mxu0 0.0
        %1341 = vmatprep.subr.mxu0 0.0
        %1342 = vmatpush2.msra.mxu0 0.0
        %1343 = vmatprep.subr.mxu0 0.0
        %1344 = vmatpush2.msra.mxu0 0.0
        %1345 = vmatprep.subr.mxu0 0.0
        %1346 = vmatpush2.msra.mxu0 0.0
        %1347 = vmatprep.subr.mxu0 0.0
        %1348 = vmatpush2.msra.mxu0 0.0
        %1349 = vmatprep.subr.mxu0 0.0
        %1350 = vmatpush2.msra.mxu0 0.0
        %1351 = vmatprep.subr.mxu0 0.0
        %1352 = vmatpush2.msra.mxu0 0.0
        %1353 = vmatprep.subr.mxu0 0.0
        %1354 = vmatpush2.msra.mxu0 0.0
        %1355 = vmatprep.mubr.f32.mxu0 0.0
        %1356 = vmatmul.mubr.f32.gmra.mxu0 %v1207
        %v1357 = vpop.f32.mrf.mxu0
        %v1358 = vadd.f32 0.0, %v1357
        %v1359 = vpop.f32.mrf.mxu0
        %v1360 = vadd.f32 0.0, %v1359
        %1361 = vdwg.mxu0
        %v1362 = vadd.f32 %v1216, %v1287
        %v1363 = vadd.f32 %v1217, %v1289
        %v1364 = vadd.f32 %v1218, %v1358
        %v1365 = vadd.f32 %v1219, %v1360
        %v1366 = vxor.u32 %v1362, 2147483648
        %v1367 = vmul.f32 %v1366, 1.442695
        %v1368 = vpow.pop %v1367
        %v1369 = vadd.f32 %v1368, 1.0
        %v1370 = vrcp.pop %v1369
        %v1371 = vmul.f32 1.0, %v1370
        %v1372 = vxor.u32 %v1363, 2147483648
        %v1373 = vmul.f32 %v1372, 1.442695
        %v1374 = vpow.pop %v1373
        %v1375 = vadd.f32 %v1374, 1.0
        %v1376 = vrcp.pop %v1375
        %v1377 = vmul.f32 1.0, %v1376
        %v1378 = vtanh.pop %v1364
        %v1379 = vxor.u32 %v1365, 2147483648
        %v1380 = vmul.f32 %v1379, 1.442695
        %v1381 = vpow.pop %v1380
        %v1382 = vadd.f32 %v1381, 1.0
        %v1383 = vrcp.pop %v1382
        %v1384 = vmul.f32 1.0, %v1383
        %v1385 = vmul.f32 %v1377, %v1205
        %v1386 = vmul.f32 %v1371, %v1378
        %v1387 = vadd.f32 %v1385, %v1386
        %v1388 = vtanh.pop %v1387
        %v1389 = vmul.f32 %v1384, %v1388
        %s1390 = smul.u32 %s1212, 8
        %s1391 = scalar_lea.vmem %s202, %s1390 [#allocation4]
        %1392 = vst [vmem:[%s1391] sm:$0xff] %v1389
        %s1393 = smul.u32 %s17, 4294967291
        %s1394 = sadd.s32 %s1393, 6
        %s1395 = smul.u32 %s1394, 4
        %s1396 = smul.addr %s1395, 8
        %s1397 = scalar_lea.vmem %s216, %s1396
        %v1398 = vld [vmem:[%s1397] sm:$0xff]
        %v1399 = vld [vmem:[%s1397 + $0x8] sm:$0xff]
        %v1400 = vld [vmem:[%s1397 + $0x10] sm:$0xff]
        %v1401 = vld [vmem:[%s1397 + $0x18] sm:$0xff]
        %1402 = vmatprep.subr.mxu0 %v299
        %1403 = vmatpush1.msra.mxu0 %v298
        %1404 = vmatprep.subr.mxu0 %v295
        %1405 = vmatpush1.msra.mxu0 %v294
        %1406 = vmatprep.subr.mxu0 %v291
        %1407 = vmatpush1.msra.mxu0 %v290
        %1408 = vmatprep.subr.mxu0 %v287
        %1409 = vmatpush1.msra.mxu0 %v286
        %1410 = vmatprep.subr.mxu0 %v283
        %1411 = vmatpush1.msra.mxu0 %v282
        %1412 = vmatprep.subr.mxu0 %v279
        %1413 = vmatpush1.msra.mxu0 %v278
        %1414 = vmatprep.subr.mxu0 %v275
        %1415 = vmatpush1.msra.mxu0 %v274
        %1416 = vmatprep.subr.mxu0 %v271
        %1417 = vmatpush1.msra.mxu0 %v270
        %1418 = vmatprep.subr.mxu0 %v267
        %1419 = vmatpush1.msra.mxu0 %v266
        %1420 = vmatprep.subr.mxu0 %v263
        %1421 = vmatpush1.msra.mxu0 %v262
        %1422 = vmatprep.subr.mxu0 %v259
        %1423 = vmatpush1.msra.mxu0 %v258
        %1424 = vmatprep.subr.mxu0 %v255
        %1425 = vmatpush1.msra.mxu0 %v254
        %1426 = vmatprep.subr.mxu0 %v251
        %1427 = vmatpush1.msra.mxu0 %v250
        %1428 = vmatprep.subr.mxu0 %v247
        %1429 = vmatpush1.msra.mxu0 %v246
        %1430 = vmatprep.subr.mxu0 %v243
        %1431 = vmatpush1.msra.mxu0 %v242
        %1432 = vmatprep.subr.mxu0 %v239
        %1433 = vmatpush1.msra.mxu0 %v238
        %1434 = vmatprep.subr.mxu0 0.0
        %1435 = vmatpush2.msra.mxu0 0.0
        %1436 = vmatprep.subr.mxu0 0.0
        %1437 = vmatpush2.msra.mxu0 0.0
        %1438 = vmatprep.subr.mxu0 0.0
        %1439 = vmatpush2.msra.mxu0 0.0
        %1440 = vmatprep.subr.mxu0 0.0
        %1441 = vmatpush2.msra.mxu0 0.0
        %1442 = vmatprep.subr.mxu0 0.0
        %1443 = vmatpush2.msra.mxu0 0.0
        %1444 = vmatprep.subr.mxu0 0.0
        %1445 = vmatpush2.msra.mxu0 0.0
        %1446 = vmatprep.subr.mxu0 0.0
        %1447 = vmatpush2.msra.mxu0 0.0
        %1448 = vmatprep.subr.mxu0 0.0
        %1449 = vmatpush2.msra.mxu0 0.0
        %1450 = vmatprep.subr.mxu0 0.0
        %1451 = vmatpush2.msra.mxu0 0.0
        %1452 = vmatprep.subr.mxu0 0.0
        %1453 = vmatpush2.msra.mxu0 0.0
        %1454 = vmatprep.subr.mxu0 0.0
        %1455 = vmatpush2.msra.mxu0 0.0
        %1456 = vmatprep.subr.mxu0 0.0
        %1457 = vmatpush2.msra.mxu0 0.0
        %1458 = vmatprep.subr.mxu0 0.0
        %1459 = vmatpush2.msra.mxu0 0.0
        %1460 = vmatprep.subr.mxu0 0.0
        %1461 = vmatpush2.msra.mxu0 0.0
        %1462 = vmatprep.subr.mxu0 0.0
        %1463 = vmatpush2.msra.mxu0 0.0
        %1464 = vmatprep.subr.mxu0 0.0
        %1465 = vmatpush2.msra.mxu0 0.0
        %1466 = vmatprep.mubr.f32.mxu0 0.0
        %1467 = vmatmul.mubr.f32.gmra.mxu0 %v1389
        %v1468 = vpop.f32.mrf.mxu0
        %v1469 = vadd.f32 0.0, %v1468
        %v1470 = vpop.f32.mrf.mxu0
        %v1471 = vadd.f32 0.0, %v1470
        %1472 = vdwg.mxu0
        %1473 = vmatprep.subr.mxu0 %v301
        %1474 = vmatpush1.msra.mxu0 %v300
        %1475 = vmatprep.subr.mxu0 %v297
        %1476 = vmatpush1.msra.mxu0 %v296
        %1477 = vmatprep.subr.mxu0 %v293
        %1478 = vmatpush1.msra.mxu0 %v292
        %1479 = vmatprep.subr.mxu0 %v289
        %1480 = vmatpush1.msra.mxu0 %v288
        %1481 = vmatprep.subr.mxu0 %v285
        %1482 = vmatpush1.msra.mxu0 %v284
        %1483 = vmatprep.subr.mxu0 %v281
        %1484 = vmatpush1.msra.mxu0 %v280
        %1485 = vmatprep.subr.mxu0 %v277
        %1486 = vmatpush1.msra.mxu0 %v276
        %1487 = vmatprep.subr.mxu0 %v273
        %1488 = vmatpush1.msra.mxu0 %v272
        %1489 = vmatprep.subr.mxu0 %v269
        %1490 = vmatpush1.msra.mxu0 %v268
        %1491 = vmatprep.subr.mxu0 %v265
        %1492 = vmatpush1.msra.mxu0 %v264
        %1493 = vmatprep.subr.mxu0 %v261
        %1494 = vmatpush1.msra.mxu0 %v260
        %1495 = vmatprep.subr.mxu0 %v257
        %1496 = vmatpush1.msra.mxu0 %v256
        %1497 = vmatprep.subr.mxu0 %v253
        %1498 = vmatpush1.msra.mxu0 %v252
        %1499 = vmatprep.subr.mxu0 %v249
        %1500 = vmatpush1.msra.mxu0 %v248
        %1501 = vmatprep.subr.mxu0 %v245
        %1502 = vmatpush1.msra.mxu0 %v244
        %1503 = vmatprep.subr.mxu0 %v241
        %1504 = vmatpush1.msra.mxu0 %v240
        %1505 = vmatprep.subr.mxu0 0.0
        %1506 = vmatpush2.msra.mxu0 0.0
        %1507 = vmatprep.subr.mxu0 0.0
        %1508 = vmatpush2.msra.mxu0 0.0
        %1509 = vmatprep.subr.mxu0 0.0
        %1510 = vmatpush2.msra.mxu0 0.0
        %1511 = vmatprep.subr.mxu0 0.0
        %1512 = vmatpush2.msra.mxu0 0.0
        %1513 = vmatprep.subr.mxu0 0.0
        %1514 = vmatpush2.msra.mxu0 0.0
        %1515 = vmatprep.subr.mxu0 0.0
        %1516 = vmatpush2.msra.mxu0 0.0
        %1517 = vmatprep.subr.mxu0 0.0
        %1518 = vmatpush2.msra.mxu0 0.0
        %1519 = vmatprep.subr.mxu0 0.0
        %1520 = vmatpush2.msra.mxu0 0.0
        %1521 = vmatprep.subr.mxu0 0.0
        %1522 = vmatpush2.msra.mxu0 0.0
        %1523 = vmatprep.subr.mxu0 0.0
        %1524 = vmatpush2.msra.mxu0 0.0
        %1525 = vmatprep.subr.mxu0 0.0
        %1526 = vmatpush2.msra.mxu0 0.0
        %1527 = vmatprep.subr.mxu0 0.0
        %1528 = vmatpush2.msra.mxu0 0.0
        %1529 = vmatprep.subr.mxu0 0.0
        %1530 = vmatpush2.msra.mxu0 0.0
        %1531 = vmatprep.subr.mxu0 0.0
        %1532 = vmatpush2.msra.mxu0 0.0
        %1533 = vmatprep.subr.mxu0 0.0
        %1534 = vmatpush2.msra.mxu0 0.0
        %1535 = vmatprep.subr.mxu0 0.0
        %1536 = vmatpush2.msra.mxu0 0.0
        %1537 = vmatprep.mubr.f32.mxu0 0.0
        %1538 = vmatmul.mubr.f32.gmra.mxu0 %v1389
        %v1539 = vpop.f32.mrf.mxu0
        %v1540 = vadd.f32 0.0, %v1539
        %v1541 = vpop.f32.mrf.mxu0
        %v1542 = vadd.f32 0.0, %v1541
        %1543 = vdwg.mxu0
        %v1544 = vadd.f32 %v1398, %v1469
        %v1545 = vadd.f32 %v1399, %v1471
        %v1546 = vadd.f32 %v1400, %v1540
        %v1547 = vadd.f32 %v1401, %v1542
        %v1548 = vxor.u32 %v1544, 2147483648
        %v1549 = vmul.f32 %v1548, 1.442695
        %v1550 = vpow.pop %v1549
        %v1551 = vadd.f32 %v1550, 1.0
        %v1552 = vrcp.pop %v1551
        %v1553 = vmul.f32 1.0, %v1552
        %v1554 = vxor.u32 %v1545, 2147483648
        %v1555 = vmul.f32 %v1554, 1.442695
        %v1556 = vpow.pop %v1555
        %v1557 = vadd.f32 %v1556, 1.0
        %v1558 = vrcp.pop %v1557
        %v1559 = vmul.f32 1.0, %v1558
        %v1560 = vtanh.pop %v1546
        %v1561 = vxor.u32 %v1547, 2147483648
        %v1562 = vmul.f32 %v1561, 1.442695
        %v1563 = vpow.pop %v1562
        %v1564 = vadd.f32 %v1563, 1.0
        %v1565 = vrcp.pop %v1564
        %v1566 = vmul.f32 1.0, %v1565
        %v1567 = vmul.f32 %v1559, %v1387
        %v1568 = vmul.f32 %v1553, %v1560
        %v1569 = vadd.f32 %v1567, %v1568
        %v1570 = vtanh.pop %v1569
        %v1571 = vmul.f32 %v1566, %v1570
        %s1572 = smul.u32 %s1394, 8
        %s1573 = scalar_lea.vmem %s202, %s1572 [#allocation4]
        %1574 = vst [vmem:[%s1573] sm:$0xff] %v1571
        %s1575 = smul.u32 %s17, 4294967289
        %s1576 = sadd.s32 %s1575, 7
        %s1577 = smul.u32 %s1576, 4
        %s1578 = smul.addr %s1577, 8
        %s1579 = scalar_lea.vmem %s216, %s1578
        %v1580 = vld [vmem:[%s1579] sm:$0xff]
        %v1581 = vld [vmem:[%s1579 + $0x8] sm:$0xff]
        %v1582 = vld [vmem:[%s1579 + $0x10] sm:$0xff]
        %v1583 = vld [vmem:[%s1579 + $0x18] sm:$0xff]
        %1584 = vmatprep.subr.mxu0 %v299
        %1585 = vmatpush1.msra.mxu0 %v298
        %1586 = vmatprep.subr.mxu0 %v295
        %1587 = vmatpush1.msra.mxu0 %v294
        %1588 = vmatprep.subr.mxu0 %v291
        %1589 = vmatpush1.msra.mxu0 %v290
        %1590 = vmatprep.subr.mxu0 %v287
        %1591 = vmatpush1.msra.mxu0 %v286
        %1592 = vmatprep.subr.mxu0 %v283
        %1593 = vmatpush1.msra.mxu0 %v282
        %1594 = vmatprep.subr.mxu0 %v279
        %1595 = vmatpush1.msra.mxu0 %v278
        %1596 = vmatprep.subr.mxu0 %v275
        %1597 = vmatpush1.msra.mxu0 %v274
        %1598 = vmatprep.subr.mxu0 %v271
        %1599 = vmatpush1.msra.mxu0 %v270
        %1600 = vmatprep.subr.mxu0 %v267
        %1601 = vmatpush1.msra.mxu0 %v266
        %1602 = vmatprep.subr.mxu0 %v263
        %1603 = vmatpush1.msra.mxu0 %v262
        %1604 = vmatprep.subr.mxu0 %v259
        %1605 = vmatpush1.msra.mxu0 %v258
        %1606 = vmatprep.subr.mxu0 %v255
        %1607 = vmatpush1.msra.mxu0 %v254
        %1608 = vmatprep.subr.mxu0 %v251
        %1609 = vmatpush1.msra.mxu0 %v250
        %1610 = vmatprep.subr.mxu0 %v247
        %1611 = vmatpush1.msra.mxu0 %v246
        %1612 = vmatprep.subr.mxu0 %v243
        %1613 = vmatpush1.msra.mxu0 %v242
        %1614 = vmatprep.subr.mxu0 %v239
        %1615 = vmatpush1.msra.mxu0 %v238
        %1616 = vmatprep.subr.mxu0 0.0
        %1617 = vmatpush2.msra.mxu0 0.0
        %1618 = vmatprep.subr.mxu0 0.0
        %1619 = vmatpush2.msra.mxu0 0.0
        %1620 = vmatprep.subr.mxu0 0.0
        %1621 = vmatpush2.msra.mxu0 0.0
        %1622 = vmatprep.subr.mxu0 0.0
        %1623 = vmatpush2.msra.mxu0 0.0
        %1624 = vmatprep.subr.mxu0 0.0
        %1625 = vmatpush2.msra.mxu0 0.0
        %1626 = vmatprep.subr.mxu0 0.0
        %1627 = vmatpush2.msra.mxu0 0.0
        %1628 = vmatprep.subr.mxu0 0.0
        %1629 = vmatpush2.msra.mxu0 0.0
        %1630 = vmatprep.subr.mxu0 0.0
        %1631 = vmatpush2.msra.mxu0 0.0
        %1632 = vmatprep.subr.mxu0 0.0
        %1633 = vmatpush2.msra.mxu0 0.0
        %1634 = vmatprep.subr.mxu0 0.0
        %1635 = vmatpush2.msra.mxu0 0.0
        %1636 = vmatprep.subr.mxu0 0.0
        %1637 = vmatpush2.msra.mxu0 0.0
        %1638 = vmatprep.subr.mxu0 0.0
        %1639 = vmatpush2.msra.mxu0 0.0
        %1640 = vmatprep.subr.mxu0 0.0
        %1641 = vmatpush2.msra.mxu0 0.0
        %1642 = vmatprep.subr.mxu0 0.0
        %1643 = vmatpush2.msra.mxu0 0.0
        %1644 = vmatprep.subr.mxu0 0.0
        %1645 = vmatpush2.msra.mxu0 0.0
        %1646 = vmatprep.subr.mxu0 0.0
        %1647 = vmatpush2.msra.mxu0 0.0
        %1648 = vmatprep.mubr.f32.mxu0 0.0
        %1649 = vmatmul.mubr.f32.gmra.mxu0 %v1571
        %v1650 = vpop.f32.mrf.mxu0
        %v1651 = vadd.f32 0.0, %v1650
        %v1652 = vpop.f32.mrf.mxu0
        %v1653 = vadd.f32 0.0, %v1652
        %1654 = vdwg.mxu0
        %1655 = vmatprep.subr.mxu0 %v301
        %1656 = vmatpush1.msra.mxu0 %v300
        %1657 = vmatprep.subr.mxu0 %v297
        %1658 = vmatpush1.msra.mxu0 %v296
        %1659 = vmatprep.subr.mxu0 %v293
        %1660 = vmatpush1.msra.mxu0 %v292
        %1661 = vmatprep.subr.mxu0 %v289
        %1662 = vmatpush1.msra.mxu0 %v288
        %1663 = vmatprep.subr.mxu0 %v285
        %1664 = vmatpush1.msra.mxu0 %v284
        %1665 = vmatprep.subr.mxu0 %v281
        %1666 = vmatpush1.msra.mxu0 %v280
        %1667 = vmatprep.subr.mxu0 %v277
        %1668 = vmatpush1.msra.mxu0 %v276
        %1669 = vmatprep.subr.mxu0 %v273
        %1670 = vmatpush1.msra.mxu0 %v272
        %1671 = vmatprep.subr.mxu0 %v269
        %1672 = vmatpush1.msra.mxu0 %v268
        %1673 = vmatprep.subr.mxu0 %v265
        %1674 = vmatpush1.msra.mxu0 %v264
        %1675 = vmatprep.subr.mxu0 %v261
        %1676 = vmatpush1.msra.mxu0 %v260
        %1677 = vmatprep.subr.mxu0 %v257
        %1678 = vmatpush1.msra.mxu0 %v256
        %1679 = vmatprep.subr.mxu0 %v253
        %1680 = vmatpush1.msra.mxu0 %v252
        %1681 = vmatprep.subr.mxu0 %v249
        %1682 = vmatpush1.msra.mxu0 %v248
        %1683 = vmatprep.subr.mxu0 %v245
        %1684 = vmatpush1.msra.mxu0 %v244
        %1685 = vmatprep.subr.mxu0 %v241
        %1686 = vmatpush1.msra.mxu0 %v240
        %1687 = vmatprep.subr.mxu0 0.0
        %1688 = vmatpush2.msra.mxu0 0.0
        %1689 = vmatprep.subr.mxu0 0.0
        %1690 = vmatpush2.msra.mxu0 0.0
        %1691 = vmatprep.subr.mxu0 0.0
        %1692 = vmatpush2.msra.mxu0 0.0
        %1693 = vmatprep.subr.mxu0 0.0
        %1694 = vmatpush2.msra.mxu0 0.0
        %1695 = vmatprep.subr.mxu0 0.0
        %1696 = vmatpush2.msra.mxu0 0.0
        %1697 = vmatprep.subr.mxu0 0.0
        %1698 = vmatpush2.msra.mxu0 0.0
        %1699 = vmatprep.subr.mxu0 0.0
        %1700 = vmatpush2.msra.mxu0 0.0
        %1701 = vmatprep.subr.mxu0 0.0
        %1702 = vmatpush2.msra.mxu0 0.0
        %1703 = vmatprep.subr.mxu0 0.0
        %1704 = vmatpush2.msra.mxu0 0.0
        %1705 = vmatprep.subr.mxu0 0.0
        %1706 = vmatpush2.msra.mxu0 0.0
        %1707 = vmatprep.subr.mxu0 0.0
        %1708 = vmatpush2.msra.mxu0 0.0
        %1709 = vmatprep.subr.mxu0 0.0
        %1710 = vmatpush2.msra.mxu0 0.0
        %1711 = vmatprep.subr.mxu0 0.0
        %1712 = vmatpush2.msra.mxu0 0.0
        %1713 = vmatprep.subr.mxu0 0.0
        %1714 = vmatpush2.msra.mxu0 0.0
        %1715 = vmatprep.subr.mxu0 0.0
        %1716 = vmatpush2.msra.mxu0 0.0
        %1717 = vmatprep.subr.mxu0 0.0
        %1718 = vmatpush2.msra.mxu0 0.0
        %1719 = vmatprep.mubr.f32.mxu0 0.0
        %1720 = vmatmul.mubr.f32.gmra.mxu0 %v1571
        %v1721 = vpop.f32.mrf.mxu0
        %v1722 = vadd.f32 0.0, %v1721
        %v1723 = vpop.f32.mrf.mxu0
        %v1724 = vadd.f32 0.0, %v1723
        %1725 = vdwg.mxu0
        %v1726 = vadd.f32 %v1580, %v1651
        %v1727 = vadd.f32 %v1581, %v1653
        %v1728 = vadd.f32 %v1582, %v1722
        %v1729 = vadd.f32 %v1583, %v1724
        %v1730 = vxor.u32 %v1726, 2147483648
        %v1731 = vmul.f32 %v1730, 1.442695
        %v1732 = vpow.pop %v1731
        %v1733 = vadd.f32 %v1732, 1.0
        %v1734 = vrcp.pop %v1733
        %v1735 = vmul.f32 1.0, %v1734
        %v1736 = vxor.u32 %v1727, 2147483648
        %v1737 = vmul.f32 %v1736, 1.442695
        %v1738 = vpow.pop %v1737
        %v1739 = vadd.f32 %v1738, 1.0
        %v1740 = vrcp.pop %v1739
        %v1741 = vmul.f32 1.0, %v1740
        %v1742 = vtanh.pop %v1728
        %v1743 = vxor.u32 %v1729, 2147483648
        %v1744 = vmul.f32 %v1743, 1.442695
        %v1745 = vpow.pop %v1744
        %v1746 = vadd.f32 %v1745, 1.0
        %v1747 = vrcp.pop %v1746
        %v1748 = vmul.f32 1.0, %v1747
        %v1749 = vmul.f32 %v1741, %v1569
        %v1750 = vmul.f32 %v1735, %v1742
        %v1751 = vadd.f32 %v1749, %v1750
        %v1752 = vtanh.pop %v1751
        %v1753 = vmul.f32 %v1748, %v1752
        %s1754 = smul.u32 %s1576, 8
        %s1755 = scalar_lea.vmem %s202, %s1754 [#allocation4]
        %1756 = vst [vmem:[%s1755] sm:$0xff] %v1753
        %1757 = vst [vmem:[#allocation2] sm:$0xff] %v1753
        %1758 = vst [vmem:[#allocation3] sm:$0xff] %v1751
        %s1759 = sand.u32 %s105, 1
        %s1760 = sand.u32 %s105, 1
        %s1761 = smul.addr %s1760, 64
        %s1762 = scalar_lea.vmem [#allocation4], %s1761
        // Predicated region
        $region33: #{lstm_forward.2} parent=27 // pred_check
          %p1763 = pneg %p115
        $region34: #{lstm_forward.2} parent=27 // pred_check_branch
          %1765 = sbr.rel (%p1763) target = $region36
        $region35: #{lstm_forward.2} parent=27 // pred_region
          %s1766 = smul.u32 %s18, 2
          %s1767 = ssub.s32 0, %s1766
          %s1768 = smul.u32 %s17, %s1767
          %s1769 = sadd.s32 %s18, %s1768
          %s1770 = smul.u32 8, %s1769
          %s1771 = smul.addr %s1770, 2
          %s1772 = sadd.s32 %s17, %s1771
          %s1773 = smul.addr %s1772, 8
          %s1774 = scalar_lea.vmem %s2, %s1773
          // Predicated region
          $region37: #{lstm_forward.2} parent=35 // pred_check
            _
          $region38: #{lstm_forward.2} parent=35 // pred_check_branch
            %1776 = sbr.rel (0) target = $region40
          $region39: #{lstm_forward.2} parent=35 // pred_region
            // Predicated region
            $region41: #{lstm_forward.2} parent=39 // pred_check
              _
            $region42: #{lstm_forward.2} parent=39 // pred_check_branch
              %1778 = sbr.rel (0) target = $region44
            $region43: #{lstm_forward.2} parent=39 // pred_region
              // Predicated region
              $region56: #{lstm_forward.2} parent=43 // pred_check
                _
              $region57: #{lstm_forward.2} parent=43 // pred_check_branch
                %1808 = sbr.rel (0) target = $region59
              $region58: #{lstm_forward.2} parent=43 // pred_region
                loop: start=0, step=1, limit=1
                $region60: #{lstm_forward.2} parent=58 // loop_pre_header
                  _
                $region61: #{lstm_forward.2} parent=58 // loop_header
                  %s1810 = sphi 0, %s1814
                  %p1811 = scmp.ge.s32.totalorder %s1810, 1
                  %s1815 = sphi %s1762, %s1762
                  %s1816 = sphi %s1774, %s1774
                $region62: #{lstm_forward.2} parent=58 // loop_header_branch
                  %1813 = sbr.rel (%p1811) target = $region66
                $region63: #{lstm_forward.2} parent=58 // loop_body
                  %v1817 = vld [vmem:[%s1815] sm:$0xff]
                  %1818 = vst [vmem:[%s1816] sm:$0xff] %v1817
                  %v1819 = vld [vmem:[%s1815 + $0x8] sm:$0xff]
                  %1820 = vst [vmem:[%s1816 + $0x10] sm:$0xff] %v1819
                  %v1821 = vld [vmem:[%s1815 + $0x10] sm:$0xff]
                  %1822 = vst [vmem:[%s1816 + $0x20] sm:$0xff] %v1821
                  %v1823 = vld [vmem:[%s1815 + $0x18] sm:$0xff]
                  %1824 = vst [vmem:[%s1816 + $0x30] sm:$0xff] %v1823
                  %v1825 = vld [vmem:[%s1815 + $0x20] sm:$0xff]
                  %1826 = vst [vmem:[%s1816 + $0x40] sm:$0xff] %v1825
                  %v1827 = vld [vmem:[%s1815 + $0x28] sm:$0xff]
                  %1828 = vst [vmem:[%s1816 + $0x50] sm:$0xff] %v1827
                  %v1829 = vld [vmem:[%s1815 + $0x30] sm:$0xff]
                  %1830 = vst [vmem:[%s1816 + $0x60] sm:$0xff] %v1829
                  %v1831 = vld [vmem:[%s1815 + $0x38] sm:$0xff]
                  %1832 = vst [vmem:[%s1816 + $0x70] sm:$0xff] %v1831
                $region64: #{lstm_forward.2} parent=58 // loop_footer
                  %s1814 = sadd.s32 1, %s1810
                $region65: #{lstm_forward.2} parent=58 // loop_footer_branch
                  %1809 = sbr.rel target = $region61
                $region66: #{lstm_forward.2} parent=58 // loop_exit
                  _
              $region59: #{lstm_forward.2} parent=43 // pred_fallthru
                _
              // Predicated region
              $region67: #{lstm_forward.2} parent=43 // pred_check
                _
              $region68: #{lstm_forward.2} parent=43 // pred_check_branch
                %1834 = sbr.rel target = $region70
              $region69: #{lstm_forward.2} parent=43 // pred_region
                _
              $region70: #{lstm_forward.2} parent=43 // pred_fallthru
                _
            $region44: #{lstm_forward.2} parent=39 // pred_fallthru
              _
            // Predicated region
            $region45: #{lstm_forward.2} parent=39 // pred_check
              _
            $region46: #{lstm_forward.2} parent=39 // pred_check_branch
              %1780 = sbr.rel target = $region48
            $region47: #{lstm_forward.2} parent=39 // pred_region
              %s1782 = ssub.s32 256, 1
              loop: start=0, step=1, limit=1
              $region49: #{lstm_forward.2} parent=47 // loop_pre_header
                _
              $region50: #{lstm_forward.2} parent=47 // loop_header
                %s1784 = sphi 0, %s1788
                %p1785 = scmp.ge.s32.totalorder %s1784, 1
                %s1789 = sphi %s1762, %s1762
                %s1790 = sphi %s1774, %s1774
              $region51: #{lstm_forward.2} parent=47 // loop_header_branch
                %1787 = sbr.rel (%p1785) target = $region55
              $region52: #{lstm_forward.2} parent=47 // loop_body
                %v1791 = vld [vmem:[%s1789] sm:%s1782]
                %1792 = vst [vmem:[%s1790] sm:%s1782] %v1791
                %v1793 = vld [vmem:[%s1789 + $0x8] sm:%s1782]
                %1794 = vst [vmem:[%s1790 + $0x10] sm:%s1782] %v1793
                %v1795 = vld [vmem:[%s1789 + $0x10] sm:%s1782]
                %1796 = vst [vmem:[%s1790 + $0x20] sm:%s1782] %v1795
                %v1797 = vld [vmem:[%s1789 + $0x18] sm:%s1782]
                %1798 = vst [vmem:[%s1790 + $0x30] sm:%s1782] %v1797
                %v1799 = vld [vmem:[%s1789 + $0x20] sm:%s1782]
                %1800 = vst [vmem:[%s1790 + $0x40] sm:%s1782] %v1799
                %v1801 = vld [vmem:[%s1789 + $0x28] sm:%s1782]
                %1802 = vst [vmem:[%s1790 + $0x50] sm:%s1782] %v1801
                %v1803 = vld [vmem:[%s1789 + $0x30] sm:%s1782]
                %1804 = vst [vmem:[%s1790 + $0x60] sm:%s1782] %v1803
                %v1805 = vld [vmem:[%s1789 + $0x38] sm:%s1782]
                %1806 = vst [vmem:[%s1790 + $0x70] sm:%s1782] %v1805
              $region53: #{lstm_forward.2} parent=47 // loop_footer
                %s1788 = sadd.s32 1, %s1784
              $region54: #{lstm_forward.2} parent=47 // loop_footer_branch
                %1783 = sbr.rel target = $region50
              $region55: #{lstm_forward.2} parent=47 // loop_exit
                _
            $region48: #{lstm_forward.2} parent=39 // pred_fallthru
              _
          $region40: #{lstm_forward.2} parent=35 // pred_fallthru
            _
          %1835 = vnop
        $region36: #{lstm_forward.2} parent=27 // pred_fallthru
          _
      $region28: #{lstm_forward.2} parent=5 // pred_fallthru
        _
      %p1836 = scmp.le.s32.totalorder 2, %s8
      // Predicated region
      $region71: #{lstm_forward.2} parent=5 // pred_check
        %p1837 = pneg %p1836
      $region72: #{lstm_forward.2} parent=5 // pred_check_branch
        %1839 = sbr.rel (%p1837) target = $region74
      $region73: #{lstm_forward.2} parent=5 // pred_region
        %s1840 = ssub.s32 %s8, 2
        // Predicated region
        $region75: #{lstm_forward.2} parent=73 // pred_check
          %p1841 = pneg %p121
        $region76: #{lstm_forward.2} parent=73 // pred_check_branch
          %1843 = sbr.rel (%p1841) target = $region78
        $region77: #{lstm_forward.2} parent=73 // pred_region
          %s1844 = sand.u32 %s106, 1
          %s1845 = sand.u32 %s106, 1
          %s1846 = smul.addr %s1845, 64
          %s1847 = scalar_lea.vmem [#allocation4], %s1846
        $region78: #{lstm_forward.2} parent=73 // pred_fallthru
          _
      $region74: #{lstm_forward.2} parent=5 // pred_fallthru
        _
    $region6: #{lstm_forward.2} parent=1 // loop_footer
      %s12 = sadd.s32 1, %s8
    $region7: #{lstm_forward.2} parent=1 // loop_footer_branch
      %7 = sbr.rel target = $region3
    $region8: #{lstm_forward.2} parent=1 // loop_exit
      _

</llo_original>
